<compile_context>
chip_gen: v6e
topology: v6e:2x2x1
jax: 0.10.0
libtpu: 0.0.40
codegen_flags: <defaults>
</compile_context>

<pallas_src>
import jax
import jax.numpy as jnp
from jax.experimental import pallas as pl
from jax.experimental.pallas import tpu as pltpu

# Scaled-down BERT config (stand-in for BertModel.from_pretrained(...)).
H = 128          # hidden size (BERT-base uses 768)
NH = 2           # attention heads
DH = H // NH     # head dim
I = 256          # FFN intermediate size
L = 2            # number of encoder layers
V = 64           # vocab size
P = 32           # max position embeddings
TYPES = 2        # token-type vocab
LN_EPS = 1e-12
NEG_INF = -10000.0
OUT_PAD = 128    # lane-dense padded width of the final (B, 1) logit


# ---------------------------------------------------------------------------
# In-kernel helpers (operate on traced values, f32)
# ---------------------------------------------------------------------------
def _gelu(x):
    # TODO(synk): HF BERT uses erf-GELU; tanh-approx keeps the EUP lowering.
    c = jnp.sqrt(2.0 / jnp.pi).astype(x.dtype)
    return 0.5 * x * (1.0 + jnp.tanh(c * (x + 0.044715 * x * x * x)))


def _layernorm(x, g, b):
    mean = jnp.mean(x, axis=-1, keepdims=True)
    xc = x - mean
    var = jnp.mean(xc * xc, axis=-1, keepdims=True)
    return xc * jax.lax.rsqrt(var + LN_EPS) * g + b


# ---------------------------------------------------------------------------
# The single fused kernel: one grid step = (batch element b, layer l)
# ---------------------------------------------------------------------------
def _bert_kernel(emb_ref, bias_ref, embg_ref, embb_ref,
                 qkvw_ref, qkvb_ref, ow_ref, ob_ref, ln1g_ref, ln1b_ref,
                 f1w_ref, f1b_ref, f2w_ref, f2b_ref, ln2g_ref, ln2b_ref,
                 poolw_ref, poolb_ref, outw_ref, outb_ref,
                 o_ref, x_scratch):
    l = pl.program_id(1)
    S = emb_ref.shape[0]                       # per-batch sequence block

    # Layer 0: fold the embedding LayerNorm into this step (x becomes resident).
    @pl.when(l == 0)
    def _():
        x_scratch[...] = _layernorm(emb_ref[...], embg_ref[...], embb_ref[...])

    x = x_scratch[...]                         # (S, H) f32, resident in VMEM
    xb = x.astype(jnp.bfloat16)

    # Fused QKV projection: one (H, 3H) bf16 matmul, f32 accumulation.
    qkv = jnp.dot(xb, qkvw_ref[...],
                  preferred_element_type=jnp.float32) + qkvb_ref[...]   # (S, 3H)
    qkv16 = qkv.astype(jnp.bfloat16)           # bf16 operands for the MXU

    # Per-head scores (bf16 MXU), packed along sublanes for ONE softmax pass.
    scale = 1.0 / float(DH) ** 0.5
    scores = []
    for h in range(NH):
        q = qkv16[:, h * DH:(h + 1) * DH]                      # (S, DH)
        k = qkv16[:, H + h * DH:H + (h + 1) * DH]              # (S, DH)
        s = jax.lax.dot_general(q, k, (((1,), (1,)), ((), ())),
                                preferred_element_type=jnp.float32)
        scores.append(s * scale)
    s_all = jnp.concatenate(scores, axis=0) + bias_ref[...]    # (NH*S, S)

    m = jnp.max(s_all, axis=-1, keepdims=True)
    p_all = jnp.exp(s_all - m)
    p_all = p_all * pl.reciprocal(jnp.sum(p_all, axis=-1, keepdims=True),
                                  approx=True)
    p16 = p_all.astype(jnp.bfloat16)

    # Per-head PV matmuls (bf16); lane-concat straight into the out-projection
    # (no ctx VMEM scratch / masked half-tile stores).
    ctx_parts = []
    for h in range(NH):
        p = p16[h * S:(h + 1) * S, :]                          # (S, S)
        v = qkv16[:, 2 * H + h * DH:2 * H + (h + 1) * DH]      # (S, DH)
        ctx_parts.append(jnp.dot(p, v, preferred_element_type=jnp.float32))
    ctx = jnp.concatenate(ctx_parts, axis=1)                   # (S, H) f32

    # Attention output projection + residual + LayerNorm.
    attn = jnp.dot(ctx.astype(jnp.bfloat16), ow_ref[...],
                   preferred_element_type=jnp.float32) + ob_ref[...]
    x1 = _layernorm(attn + x, ln1g_ref[...], ln1b_ref[...])

    # FFN (GELU) + residual + LayerNorm.
    h1 = _gelu(jnp.dot(x1.astype(jnp.bfloat16), f1w_ref[...],
                       preferred_element_type=jnp.float32) + f1b_ref[...])
    h2 = jnp.dot(h1.astype(jnp.bfloat16), f2w_ref[...],
                 preferred_element_type=jnp.float32) + b2 if False else \
         jnp.dot(h1.astype(jnp.bfloat16), f2w_ref[...],
                 preferred_element_type=jnp.float32) + f2b_ref[...]
    x_new = _layernorm(h2 + x1, ln2g_ref[...], ln2b_ref[...])
    x_scratch[...] = x_new

    # Last layer: fused pooler(tanh) + dropout(identity, eval) + Linear(H,1),
    # computed on the whole (S, H) block so the store is a full (8,128) tile;
    # only the [CLS] row / column 0 is meaningful (sliced in the wrapper).
    @pl.when(l == pl.num_programs(1) - 1)
    def _():
        pooled = jnp.tanh(
            jnp.dot(x_new.astype(jnp.bfloat16), poolw_ref[...],
                    preferred_element_type=jnp.float32) + poolb_ref[...])
        # nn.Dropout(0.3) is identity at inference (eval mode).
        # TODO(synk): training-mode dropout would need pltpu.prng_* masking.
        o_ref[...] = jnp.dot(pooled.astype(jnp.bfloat16), outw_ref[...],
                             preferred_element_type=jnp.float32) + outb_ref[...]


def bert_pallas(emb, bias_packed, p, *, batch, seq):
    M = batch * seq

    def lw(shape):      # per-layer stacked weight, prefetched along the l axis
        return pl.BlockSpec(shape, lambda b, l: (l, 0, 0))

    def shared2(shape):  # small shared param, same block every step
        return pl.BlockSpec(shape, lambda b, l: (0, 0))

    return pl.pallas_call(
        _bert_kernel,
        out_shape=jax.ShapeDtypeStruct((M, OUT_PAD), jnp.float32),
        grid=(batch, L),
        in_specs=[
            pl.BlockSpec((seq, H), lambda b, l: (b, 0)),               # emb sums
            pl.BlockSpec((None, NH * seq, seq), lambda b, l: (b, 0, 0)),  # mask bias
            shared2((1, H)), shared2((1, H)),                          # emb LN g/b
            lw((None, H, 3 * H)), lw((None, 1, 3 * H)),                # qkv w/b
            lw((None, H, H)), lw((None, 1, H)),                        # out-proj w/b
            lw((None, 1, H)), lw((None, 1, H)),                        # ln1 g/b
            lw((None, H, I)), lw((None, 1, I)),                        # ffn1 w/b
            lw((None, I, H)), lw((None, 1, H)),                        # ffn2 w/b
            lw((None, 1, H)), lw((None, 1, H)),                        # ln2 g/b
            shared2((H, H)), shared2((1, H)),                          # pooler w/b
            shared2((H, OUT_PAD)), shared2((1, OUT_PAD)),              # head w/b (padded)
        ],
        out_specs=pl.BlockSpec((seq, OUT_PAD), lambda b, l: (b, 0)),
        scratch_shapes=[pltpu.VMEM((seq, H), jnp.float32)],            # resident x
        compiler_params=pltpu.CompilerParams(
            dimension_semantics=("parallel", "arbitrary")),
    )(emb, bias_packed,
      p["emb_ln_g"], p["emb_ln_b"],
      p["qkv_w"], p["qkv_b"], p["o_w"], p["o_b"],
      p["ln1_g"], p["ln1_b"], p["f1_w"], p["f1_b"],
      p["f2_w"], p["f2_b"], p["ln2_g"], p["ln2_b"],
      p["pool_w"], p["pool_b"], p["out_w_pad"], p["out_b_pad"])


# ---------------------------------------------------------------------------
# Parameters (deterministic init in-script; no checkpoint load)
# ---------------------------------------------------------------------------
def init_params(key):
    keys = iter(jax.random.split(key, 16))

    def nrm(shape, dtype=jnp.float32):
        return (0.02 * jax.random.normal(next(keys), shape, jnp.float32)).astype(dtype)

    params = {
        "word_emb": nrm((V, H)),
        "pos_emb": nrm((P, H)),
        "type_emb": nrm((TYPES, H)),
        "emb_ln_g": jnp.ones((1, H), jnp.float32),
        "emb_ln_b": jnp.zeros((1, H), jnp.float32),
        # Stacked per-layer weights (leading L axis -> grid-prefetched blocks).
        "qkv_w": nrm((L, H, 3 * H), jnp.bfloat16),
        "qkv_b": jnp.zeros((L, 1, 3 * H), jnp.float32),
        "o_w": nrm((L, H, H), jnp.bfloat16),
        "o_b": jnp.zeros((L, 1, H), jnp.float32),
        "ln1_g": jnp.ones((L, 1, H), jnp.float32),
        "ln1_b": jnp.zeros((L, 1, H), jnp.float32),
        "f1_w": nrm((L, H, I), jnp.bfloat16),
        "f1_b": jnp.zeros((L, 1, I), jnp.float32),
        "f2_w": nrm((L, I, H), jnp.bfloat16),
        "f2_b": jnp.zeros((L, 1, H), jnp.float32),
        "ln2_g": jnp.ones((L, 1, H), jnp.float32),
        "ln2_b": jnp.zeros((L, 1, H), jnp.float32),
        "pool_w": nrm((H, H), jnp.bfloat16),
        "pool_b": jnp.zeros((1, H), jnp.float32),
    }
    # nn.Linear(hidden, 1): pad the weight/bias to 128 lanes for a dense store.
    out_w = nrm((H, 1))
    params["out_w_pad"] = (jnp.zeros((H, OUT_PAD), jnp.float32)
                           .at[:, :1].set(out_w).astype(jnp.bfloat16))
    params["out_b_pad"] = jnp.zeros((1, OUT_PAD), jnp.float32)
    return params


# ---------------------------------------------------------------------------
# Forward pass (BERTModel.forward)
# ---------------------------------------------------------------------------
def bert_sentiment_forward(params, ids, mask, token_type_ids):
    B, S = ids.shape

    # Embedding gathers + sum are XLA glue; everything else is one Pallas kernel.
    word = jnp.take(params["word_emb"], ids, axis=0)             # (B,S,H)
    typ = jnp.take(params["type_emb"], token_type_ids, axis=0)   # (B,S,H)
    pos = params["pos_emb"][:S][None, :, :]                      # (1,S,H)
    emb = (word + pos + typ).reshape(B * S, H)

    # Additive attention-mask bias, pre-broadcast to the packed per-head
    # sublane layout used inside the kernel: (B, NH*S, S).
    bias = (1.0 - mask.astype(jnp.float32)) * NEG_INF            # (B,S)
    bias_packed = jnp.broadcast_to(
        bias[:, None, None, :], (B, NH, S, S)).reshape(B, NH * S, S)

    out = bert_pallas(emb, bias_packed, params, batch=B, seq=S)  # (B*S, 128)
    # [CLS] row of each batch block, real logit in column 0.
    return out.reshape(B, S, OUT_PAD)[:, 0, :1]                  # (B,1)


if __name__ == "__main__":
    B, S = 2, 8
    key = jax.random.PRNGKey(0)
    pkey, ikey = jax.random.split(key)
    params = init_params(pkey)

    ids = jax.random.randint(ikey, (B, S), 0, V, dtype=jnp.int32)
    mask = jnp.ones((B, S), jnp.int32).at[1, 6:].set(0)          # pad last 2 of row 1
    token_type_ids = jnp.zeros((B, S), jnp.int32).at[:, 4:].set(1)

    out = jax.jit(bert_sentiment_forward)(params, ids, mask, token_type_ids)
    out = jax.block_until_ready(out)
    assert out.shape == (B, 1) and out.dtype == jnp.float32
    print("KERNEL_OK")
</pallas_src>

<mosaic_0001>
module attributes {stable_mosaic.version = 11 : i64} {
  func.func @_bert_kernel(%arg0: i32, %arg1: i32, %arg2: memref<8x128xf32, #tpu.memory_space<vmem>>, %arg3: memref<1x16x8xf32, #tpu.memory_space<vmem>>, %arg4: memref<1x128xf32, #tpu.memory_space<vmem>>, %arg5: memref<1x128xf32, #tpu.memory_space<vmem>>, %arg6: memref<1x128x384xbf16, #tpu.memory_space<vmem>>, %arg7: memref<1x1x384xf32, #tpu.memory_space<vmem>>, %arg8: memref<1x128x128xbf16, #tpu.memory_space<vmem>>, %arg9: memref<1x1x128xf32, #tpu.memory_space<vmem>>, %arg10: memref<1x1x128xf32, #tpu.memory_space<vmem>>, %arg11: memref<1x1x128xf32, #tpu.memory_space<vmem>>, %arg12: memref<1x128x256xbf16, #tpu.memory_space<vmem>>, %arg13: memref<1x1x256xf32, #tpu.memory_space<vmem>>, %arg14: memref<1x256x128xbf16, #tpu.memory_space<vmem>>, %arg15: memref<1x1x128xf32, #tpu.memory_space<vmem>>, %arg16: memref<1x1x128xf32, #tpu.memory_space<vmem>>, %arg17: memref<1x1x128xf32, #tpu.memory_space<vmem>>, %arg18: memref<128x128xbf16, #tpu.memory_space<vmem>>, %arg19: memref<1x128xf32, #tpu.memory_space<vmem>>, %arg20: memref<128x128xbf16, #tpu.memory_space<vmem>>, %arg21: memref<1x128xf32, #tpu.memory_space<vmem>>, %arg22: memref<8x128xf32, #tpu.memory_space<vmem>>, %arg23: memref<8x128xf32, #tpu.memory_space<vmem>>) attributes {dimension_semantics = [#tpu.dimension_semantics<parallel>, #tpu.dimension_semantics<arbitrary>], iteration_bounds = array<i64: 2, 2>, scalar_prefetch = 0 : i64, scratch_operands = 1 : i64, tpu.core_type = #tpu.core_type<tc>, window_params = [{transform_indices = @transform_0, window_bounds = array<i64: 8, 128>}, {transform_indices = @transform_1, window_bounds = array<i64: 1, 16, 8>}, {pipeline_mode = #tpu.pipeline_mode<synchronous>, transform_indices = @transform_2, window_bounds = array<i64: 1, 128>}, {pipeline_mode = #tpu.pipeline_mode<synchronous>, transform_indices = @transform_3, window_bounds = array<i64: 1, 128>}, {transform_indices = @transform_4, window_bounds = array<i64: 1, 128, 384>}, {transform_indices = @transform_5, window_bounds = array<i64: 1, 1, 384>}, {transform_indices = @transform_6, window_bounds = array<i64: 1, 128, 128>}, {transform_indices = @transform_7, window_bounds = array<i64: 1, 1, 128>}, {transform_indices = @transform_8, window_bounds = array<i64: 1, 1, 128>}, {transform_indices = @transform_9, window_bounds = array<i64: 1, 1, 128>}, {transform_indices = @transform_10, window_bounds = array<i64: 1, 128, 256>}, {transform_indices = @transform_11, window_bounds = array<i64: 1, 1, 256>}, {transform_indices = @transform_12, window_bounds = array<i64: 1, 256, 128>}, {transform_indices = @transform_13, window_bounds = array<i64: 1, 1, 128>}, {transform_indices = @transform_14, window_bounds = array<i64: 1, 1, 128>}, {transform_indices = @transform_15, window_bounds = array<i64: 1, 1, 128>}, {pipeline_mode = #tpu.pipeline_mode<synchronous>, transform_indices = @transform_16, window_bounds = array<i64: 128, 128>}, {pipeline_mode = #tpu.pipeline_mode<synchronous>, transform_indices = @transform_17, window_bounds = array<i64: 1, 128>}, {pipeline_mode = #tpu.pipeline_mode<synchronous>, transform_indices = @transform_18, window_bounds = array<i64: 128, 128>}, {pipeline_mode = #tpu.pipeline_mode<synchronous>, transform_indices = @transform_19, window_bounds = array<i64: 1, 128>}, {transform_indices = @transform_20, window_bounds = array<i64: 8, 128>}]} {
    %c0_i32 = arith.constant 0 : i32
    %0 = arith.cmpi eq, %arg1, %c0_i32 : i32
    %1 = arith.extui %0 : i1 to i32
    %c0_i32_0 = arith.constant 0 : i32
    %2 = arith.cmpi ne, %1, %c0_i32_0 : i32
    scf.if %2 {
      %c0_69 = arith.constant 0 : index
      %c0_70 = arith.constant 0 : index
      %137 = vector.load %arg2[%c0_69, %c0_70] : memref<8x128xf32, #tpu.memory_space<vmem>>, vector<8x128xf32>
      %c0_71 = arith.constant 0 : index
      %c0_72 = arith.constant 0 : index
      %138 = vector.load %arg4[%c0_71, %c0_72] : memref<1x128xf32, #tpu.memory_space<vmem>>, vector<1x128xf32>
      %c0_73 = arith.constant 0 : index
      %c0_74 = arith.constant 0 : index
      %139 = vector.load %arg5[%c0_73, %c0_74] : memref<1x128xf32, #tpu.memory_space<vmem>>, vector<1x128xf32>
      %cst_75 = arith.constant dense<0.000000e+00> : vector<8xf32>
      %140 = vector.multi_reduction <add>, %137, %cst_75 [1] : vector<8x128xf32> to vector<8xf32>
      %141 = vector.shape_cast %140 : vector<8xf32> to vector<8x1xf32>
      %cst_76 = arith.constant 1.280000e+02 : f32
      %142 = vector.broadcast %cst_76 : f32 to vector<8x1xf32>
      %143 = arith.divf %141, %142 : vector<8x1xf32>
      %144 = vector.broadcast %143 : vector<8x1xf32> to vector<8x128xf32>
      %145 = arith.subf %137, %144 : vector<8x128xf32>
      %146 = arith.mulf %145, %145 : vector<8x128xf32>
      %cst_77 = arith.constant dense<0.000000e+00> : vector<8xf32>
      %147 = vector.multi_reduction <add>, %146, %cst_77 [1] : vector<8x128xf32> to vector<8xf32>
      %148 = vector.shape_cast %147 : vector<8xf32> to vector<8x1xf32>
      %cst_78 = arith.constant 1.280000e+02 : f32
      %149 = vector.broadcast %cst_78 : f32 to vector<8x1xf32>
      %150 = arith.divf %148, %149 : vector<8x1xf32>
      %cst_79 = arith.constant 9.99999996E-13 : f32
      %151 = vector.broadcast %cst_79 : f32 to vector<8x1xf32>
      %152 = arith.addf %150, %151 : vector<8x1xf32>
      %153 = math.rsqrt %152 : vector<8x1xf32>
      %154 = vector.broadcast %153 : vector<8x1xf32> to vector<8x128xf32>
      %155 = arith.mulf %145, %154 : vector<8x128xf32>
      %156 = vector.broadcast %138 : vector<1x128xf32> to vector<8x128xf32>
      %157 = arith.mulf %155, %156 : vector<8x128xf32>
      %158 = vector.broadcast %139 : vector<1x128xf32> to vector<8x128xf32>
      %159 = arith.addf %157, %158 : vector<8x128xf32>
      %c0_80 = arith.constant 0 : index
      %c0_81 = arith.constant 0 : index
      %160 = vector.load %arg23[%c0_80, %c0_81] : memref<8x128xf32, #tpu.memory_space<vmem>>, vector<8x128xf32>
      tpu.vector_store %arg23[%c0_80, %c0_81], %159 {strides = array<i32>} : memref<8x128xf32, #tpu.memory_space<vmem>>, vector<8x128xf32>,
    } else {
    }
    %c0 = arith.constant 0 : index
    %c0_1 = arith.constant 0 : index
    %3 = vector.load %arg23[%c0, %c0_1] : memref<8x128xf32, #tpu.memory_space<vmem>>, vector<8x128xf32>
    %4 = arith.truncf %3 : vector<8x128xf32> to vector<8x128xbf16>
    %c0_2 = arith.constant 0 : index
    %c0_3 = arith.constant 0 : index
    %c0_4 = arith.constant 0 : index
    %5 = vector.load %arg6[%c0_2, %c0_3, %c0_4] : memref<1x128x384xbf16, #tpu.memory_space<vmem>>, vector<1x128x384xbf16>
    %6 = vector.shape_cast %5 : vector<1x128x384xbf16> to vector<128x384xbf16>
    %cst = arith.constant dense<0.000000e+00> : vector<8x384xf32>
    %7 = tpu.matmul %4, %6, %cst {dimension_numbers = #tpu.dot_dimension_numbers<[1], [0], [0], [1], [0, 0, 1, 1], [], []>} : vector<8x128xbf16>, vector<128x384xbf16>, vector<8x384xf32> -> vector<8x384xf32>
    %c0_5 = arith.constant 0 : index
    %c0_6 = arith.constant 0 : index
    %c0_7 = arith.constant 0 : index
    %8 = vector.load %arg7[%c0_5, %c0_6, %c0_7] : memref<1x1x384xf32, #tpu.memory_space<vmem>>, vector<1x1x384xf32>
    %9 = vector.shape_cast %8 : vector<1x1x384xf32> to vector<1x384xf32>
    %10 = vector.broadcast %9 : vector<1x384xf32> to vector<8x384xf32>
    %11 = arith.addf %7, %10 : vector<8x384xf32>
    %12 = arith.truncf %11 : vector<8x384xf32> to vector<8x384xbf16>
    %13 = vector.extract_strided_slice %12 {offsets = [0, 0], sizes = [8, 64], strides = [1, 1]} : vector<8x384xbf16> to vector<8x64xbf16>
    %14 = vector.extract_strided_slice %12 {offsets = [0, 128], sizes = [8, 64], strides = [1, 1]} : vector<8x384xbf16> to vector<8x64xbf16>
    %cst_8 = arith.constant dense<0.000000e+00> : vector<8x8xf32>
    %15 = tpu.matmul %13, %14, %cst_8 {dimension_numbers = #tpu.dot_dimension_numbers<[1], [1], [0], [0], [0, 0, 1, 0], [], []>} : vector<8x64xbf16>, vector<8x64xbf16>, vector<8x8xf32> -> vector<8x8xf32>
    %cst_9 = arith.constant 1.250000e-01 : f32
    %16 = vector.broadcast %cst_9 : f32 to vector<8x8xf32>
    %17 = arith.mulf %15, %16 : vector<8x8xf32>
    %18 = vector.extract_strided_slice %12 {offsets = [0, 64], sizes = [8, 64], strides = [1, 1]} : vector<8x384xbf16> to vector<8x64xbf16>
    %19 = vector.extract_strided_slice %12 {offsets = [0, 192], sizes = [8, 64], strides = [1, 1]} : vector<8x384xbf16> to vector<8x64xbf16>
    %cst_10 = arith.constant dense<0.000000e+00> : vector<8x8xf32>
    %20 = tpu.matmul %18, %19, %cst_10 {dimension_numbers = #tpu.dot_dimension_numbers<[1], [1], [0], [0], [0, 0, 1, 0], [], []>} : vector<8x64xbf16>, vector<8x64xbf16>, vector<8x8xf32> -> vector<8x8xf32>
    %cst_11 = arith.constant 1.250000e-01 : f32
    %21 = vector.broadcast %cst_11 : f32 to vector<8x8xf32>
    %22 = arith.mulf %20, %21 : vector<8x8xf32>
    %23 = tpu.concatenate %17, %22 in 0 : vector<8x8xf32>, vector<8x8xf32> -> vector<16x8xf32>
    %c0_12 = arith.constant 0 : index
    %c0_13 = arith.constant 0 : index
    %c0_14 = arith.constant 0 : index
    %24 = vector.load %arg3[%c0_12, %c0_13, %c0_14] : memref<1x16x8xf32, #tpu.memory_space<vmem>>, vector<1x16x8xf32>
    %25 = vector.shape_cast %24 : vector<1x16x8xf32> to vector<16x8xf32>
    %26 = arith.addf %23, %25 : vector<16x8xf32>
    %cst_15 = arith.constant dense<0xFF800000> : vector<16xf32>
    %27 = vector.multi_reduction <maximumf>, %26, %cst_15 [1] : vector<16x8xf32> to vector<16xf32>
    %28 = vector.shape_cast %27 : vector<16xf32> to vector<16x1xf32>
    %29 = vector.broadcast %28 : vector<16x1xf32> to vector<16x8xf32>
    %30 = arith.subf %26, %29 : vector<16x8xf32>
    %31 = math.exp %30 : vector<16x8xf32>
    %cst_16 = arith.constant dense<0.000000e+00> : vector<16xf32>
    %32 = vector.multi_reduction <add>, %31, %cst_16 [1] : vector<16x8xf32> to vector<16xf32>
    %33 = vector.shape_cast %32 : vector<16xf32> to vector<16x1xf32>
    %34 = tpu.reciprocal %33 {approx = true} : vector<16x1xf32> -> vector<16x1xf32>
    %35 = vector.broadcast %34 : vector<16x1xf32> to vector<16x8xf32>
    %36 = arith.mulf %31, %35 : vector<16x8xf32>
    %37 = arith.truncf %36 : vector<16x8xf32> to vector<16x8xbf16>
    %38 = vector.extract_strided_slice %37 {offsets = [0, 0], sizes = [8, 8], strides = [1, 1]} : vector<16x8xbf16> to vector<8x8xbf16>
    %39 = vector.extract_strided_slice %12 {offsets = [0, 256], sizes = [8, 64], strides = [1, 1]} : vector<8x384xbf16> to vector<8x64xbf16>
    %cst_17 = arith.constant dense<0.000000e+00> : vector<8x64xf32>
    %40 = tpu.matmul %38, %39, %cst_17 {dimension_numbers = #tpu.dot_dimension_numbers<[1], [0], [0], [1], [0, 0, 1, 1], [], []>} : vector<8x8xbf16>, vector<8x64xbf16>, vector<8x64xf32> -> vector<8x64xf32>
    %41 = vector.extract_strided_slice %37 {offsets = [8, 0], sizes = [8, 8], strides = [1, 1]} : vector<16x8xbf16> to vector<8x8xbf16>
    %42 = vector.extract_strided_slice %12 {offsets = [0, 320], sizes = [8, 64], strides = [1, 1]} : vector<8x384xbf16> to vector<8x64xbf16>
    %cst_18 = arith.constant dense<0.000000e+00> : vector<8x64xf32>
    %43 = tpu.matmul %41, %42, %cst_18 {dimension_numbers = #tpu.dot_dimension_numbers<[1], [0], [0], [1], [0, 0, 1, 1], [], []>} : vector<8x8xbf16>, vector<8x64xbf16>, vector<8x64xf32> -> vector<8x64xf32>
    %44 = tpu.concatenate %40, %43 in 1 : vector<8x64xf32>, vector<8x64xf32> -> vector<8x128xf32>
    %45 = arith.truncf %44 : vector<8x128xf32> to vector<8x128xbf16>
    %c0_19 = arith.constant 0 : index
    %c0_20 = arith.constant 0 : index
    %c0_21 = arith.constant 0 : index
    %46 = vector.load %arg8[%c0_19, %c0_20, %c0_21] : memref<1x128x128xbf16, #tpu.memory_space<vmem>>, vector<1x128x128xbf16>
    %47 = vector.shape_cast %46 : vector<1x128x128xbf16> to vector<128x128xbf16>
    %cst_22 = arith.constant dense<0.000000e+00> : vector<8x128xf32>
    %48 = tpu.matmul %45, %47, %cst_22 {dimension_numbers = #tpu.dot_dimension_numbers<[1], [0], [0], [1], [0, 0, 1, 1], [], []>} : vector<8x128xbf16>, vector<128x128xbf16>, vector<8x128xf32> -> vector<8x128xf32>
    %c0_23 = arith.constant 0 : index
    %c0_24 = arith.constant 0 : index
    %c0_25 = arith.constant 0 : index
    %49 = vector.load %arg9[%c0_23, %c0_24, %c0_25] : memref<1x1x128xf32, #tpu.memory_space<vmem>>, vector<1x1x128xf32>
    %50 = vector.shape_cast %49 : vector<1x1x128xf32> to vector<1x128xf32>
    %51 = vector.broadcast %50 : vector<1x128xf32> to vector<8x128xf32>
    %52 = arith.addf %48, %51 : vector<8x128xf32>
    %53 = arith.addf %52, %3 : vector<8x128xf32>
    %c0_26 = arith.constant 0 : index
    %c0_27 = arith.constant 0 : index
    %c0_28 = arith.constant 0 : index
    %54 = vector.load %arg10[%c0_26, %c0_27, %c0_28] : memref<1x1x128xf32, #tpu.memory_space<vmem>>, vector<1x1x128xf32>
    %55 = vector.shape_cast %54 : vector<1x1x128xf32> to vector<1x128xf32>
    %c0_29 = arith.constant 0 : index
    %c0_30 = arith.constant 0 : index
    %c0_31 = arith.constant 0 : index
    %56 = vector.load %arg11[%c0_29, %c0_30, %c0_31] : memref<1x1x128xf32, #tpu.memory_space<vmem>>, vector<1x1x128xf32>
    %57 = vector.shape_cast %56 : vector<1x1x128xf32> to vector<1x128xf32>
    %cst_32 = arith.constant dense<0.000000e+00> : vector<8xf32>
    %58 = vector.multi_reduction <add>, %53, %cst_32 [1] : vector<8x128xf32> to vector<8xf32>
    %59 = vector.shape_cast %58 : vector<8xf32> to vector<8x1xf32>
    %cst_33 = arith.constant 1.280000e+02 : f32
    %60 = vector.broadcast %cst_33 : f32 to vector<8x1xf32>
    %61 = arith.divf %59, %60 : vector<8x1xf32>
    %62 = vector.broadcast %61 : vector<8x1xf32> to vector<8x128xf32>
    %63 = arith.subf %53, %62 : vector<8x128xf32>
    %64 = arith.mulf %63, %63 : vector<8x128xf32>
    %cst_34 = arith.constant dense<0.000000e+00> : vector<8xf32>
    %65 = vector.multi_reduction <add>, %64, %cst_34 [1] : vector<8x128xf32> to vector<8xf32>
    %66 = vector.shape_cast %65 : vector<8xf32> to vector<8x1xf32>
    %cst_35 = arith.constant 1.280000e+02 : f32
    %67 = vector.broadcast %cst_35 : f32 to vector<8x1xf32>
    %68 = arith.divf %66, %67 : vector<8x1xf32>
    %cst_36 = arith.constant 9.99999996E-13 : f32
    %69 = vector.broadcast %cst_36 : f32 to vector<8x1xf32>
    %70 = arith.addf %68, %69 : vector<8x1xf32>
    %71 = math.rsqrt %70 : vector<8x1xf32>
    %72 = vector.broadcast %71 : vector<8x1xf32> to vector<8x128xf32>
    %73 = arith.mulf %63, %72 : vector<8x128xf32>
    %74 = vector.broadcast %55 : vector<1x128xf32> to vector<8x128xf32>
    %75 = arith.mulf %73, %74 : vector<8x128xf32>
    %76 = vector.broadcast %57 : vector<1x128xf32> to vector<8x128xf32>
    %77 = arith.addf %75, %76 : vector<8x128xf32>
    %78 = arith.truncf %77 : vector<8x128xf32> to vector<8x128xbf16>
    %c0_37 = arith.constant 0 : index
    %c0_38 = arith.constant 0 : index
    %c0_39 = arith.constant 0 : index
    %79 = vector.load %arg12[%c0_37, %c0_38, %c0_39] : memref<1x128x256xbf16, #tpu.memory_space<vmem>>, vector<1x128x256xbf16>
    %80 = vector.shape_cast %79 : vector<1x128x256xbf16> to vector<128x256xbf16>
    %cst_40 = arith.constant dense<0.000000e+00> : vector<8x256xf32>
    %81 = tpu.matmul %78, %80, %cst_40 {dimension_numbers = #tpu.dot_dimension_numbers<[1], [0], [0], [1], [0, 0, 1, 1], [], []>} : vector<8x128xbf16>, vector<128x256xbf16>, vector<8x256xf32> -> vector<8x256xf32>
    %c0_41 = arith.constant 0 : index
    %c0_42 = arith.constant 0 : index
    %c0_43 = arith.constant 0 : index
    %82 = vector.load %arg13[%c0_41, %c0_42, %c0_43] : memref<1x1x256xf32, #tpu.memory_space<vmem>>, vector<1x1x256xf32>
    %83 = vector.shape_cast %82 : vector<1x1x256xf32> to vector<1x256xf32>
    %84 = vector.broadcast %83 : vector<1x256xf32> to vector<8x256xf32>
    %85 = arith.addf %81, %84 : vector<8x256xf32>
    %cst_44 = arith.constant 0.636619746 : f32
    %86 = math.sqrt %cst_44 : f32
    %cst_45 = arith.constant 5.000000e-01 : f32
    %87 = vector.broadcast %cst_45 : f32 to vector<8x256xf32>
    %88 = arith.mulf %87, %85 : vector<8x256xf32>
    %cst_46 = arith.constant 4.471500e-02 : f32
    %89 = vector.broadcast %cst_46 : f32 to vector<8x256xf32>
    %90 = arith.mulf %89, %85 : vector<8x256xf32>
    %91 = arith.mulf %90, %85 : vector<8x256xf32>
    %92 = arith.mulf %91, %85 : vector<8x256xf32>
    %93 = arith.addf %85, %92 : vector<8x256xf32>
    %94 = vector.broadcast %86 : f32 to vector<8x256xf32>
    %95 = arith.mulf %94, %93 : vector<8x256xf32>
    %96 = math.tanh %95 : vector<8x256xf32>
    %cst_47 = arith.constant 1.000000e+00 : f32
    %97 = vector.broadcast %cst_47 : f32 to vector<8x256xf32>
    %98 = arith.addf %97, %96 : vector<8x256xf32>
    %99 = arith.mulf %88, %98 : vector<8x256xf32>
    %100 = arith.truncf %99 : vector<8x256xf32> to vector<8x256xbf16>
    %c0_48 = arith.constant 0 : index
    %c0_49 = arith.constant 0 : index
    %c0_50 = arith.constant 0 : index
    %101 = vector.load %arg14[%c0_48, %c0_49, %c0_50] : memref<1x256x128xbf16, #tpu.memory_space<vmem>>, vector<1x256x128xbf16>
    %102 = vector.shape_cast %101 : vector<1x256x128xbf16> to vector<256x128xbf16>
    %cst_51 = arith.constant dense<0.000000e+00> : vector<8x128xf32>
    %103 = tpu.matmul %100, %102, %cst_51 {dimension_numbers = #tpu.dot_dimension_numbers<[1], [0], [0], [1], [0, 0, 1, 1], [], []>} : vector<8x256xbf16>, vector<256x128xbf16>, vector<8x128xf32> -> vector<8x128xf32>
    %c0_52 = arith.constant 0 : index
    %c0_53 = arith.constant 0 : index
    %c0_54 = arith.constant 0 : index
    %104 = vector.load %arg15[%c0_52, %c0_53, %c0_54] : memref<1x1x128xf32, #tpu.memory_space<vmem>>, vector<1x1x128xf32>
    %105 = vector.shape_cast %104 : vector<1x1x128xf32> to vector<1x128xf32>
    %106 = vector.broadcast %105 : vector<1x128xf32> to vector<8x128xf32>
    %107 = arith.addf %103, %106 : vector<8x128xf32>
    %108 = arith.addf %107, %77 : vector<8x128xf32>
    %c0_55 = arith.constant 0 : index
    %c0_56 = arith.constant 0 : index
    %c0_57 = arith.constant 0 : index
    %109 = vector.load %arg16[%c0_55, %c0_56, %c0_57] : memref<1x1x128xf32, #tpu.memory_space<vmem>>, vector<1x1x128xf32>
    %110 = vector.shape_cast %109 : vector<1x1x128xf32> to vector<1x128xf32>
    %c0_58 = arith.constant 0 : index
    %c0_59 = arith.constant 0 : index
    %c0_60 = arith.constant 0 : index
    %111 = vector.load %arg17[%c0_58, %c0_59, %c0_60] : memref<1x1x128xf32, #tpu.memory_space<vmem>>, vector<1x1x128xf32>
    %112 = vector.shape_cast %111 : vector<1x1x128xf32> to vector<1x128xf32>
    %cst_61 = arith.constant dense<0.000000e+00> : vector<8xf32>
    %113 = vector.multi_reduction <add>, %108, %cst_61 [1] : vector<8x128xf32> to vector<8xf32>
    %114 = vector.shape_cast %113 : vector<8xf32> to vector<8x1xf32>
    %cst_62 = arith.constant 1.280000e+02 : f32
    %115 = vector.broadcast %cst_62 : f32 to vector<8x1xf32>
    %116 = arith.divf %114, %115 : vector<8x1xf32>
    %117 = vector.broadcast %116 : vector<8x1xf32> to vector<8x128xf32>
    %118 = arith.subf %108, %117 : vector<8x128xf32>
    %119 = arith.mulf %118, %118 : vector<8x128xf32>
    %cst_63 = arith.constant dense<0.000000e+00> : vector<8xf32>
    %120 = vector.multi_reduction <add>, %119, %cst_63 [1] : vector<8x128xf32> to vector<8xf32>
    %121 = vector.shape_cast %120 : vector<8xf32> to vector<8x1xf32>
    %cst_64 = arith.constant 1.280000e+02 : f32
    %122 = vector.broadcast %cst_64 : f32 to vector<8x1xf32>
    %123 = arith.divf %121, %122 : vector<8x1xf32>
    %cst_65 = arith.constant 9.99999996E-13 : f32
    %124 = vector.broadcast %cst_65 : f32 to vector<8x1xf32>
    %125 = arith.addf %123, %124 : vector<8x1xf32>
    %126 = math.rsqrt %125 : vector<8x1xf32>
    %127 = vector.broadcast %126 : vector<8x1xf32> to vector<8x128xf32>
    %128 = arith.mulf %118, %127 : vector<8x128xf32>
    %129 = vector.broadcast %110 : vector<1x128xf32> to vector<8x128xf32>
    %130 = arith.mulf %128, %129 : vector<8x128xf32>
    %131 = vector.broadcast %112 : vector<1x128xf32> to vector<8x128xf32>
    %132 = arith.addf %130, %131 : vector<8x128xf32>
    %c0_66 = arith.constant 0 : index
    %c0_67 = arith.constant 0 : index
    %133 = vector.load %arg23[%c0_66, %c0_67] : memref<8x128xf32, #tpu.memory_space<vmem>>, vector<8x128xf32>
    tpu.vector_store %arg23[%c0_66, %c0_67], %132 {strides = array<i32>} : memref<8x128xf32, #tpu.memory_space<vmem>>, vector<8x128xf32>,
    %c1_i32 = arith.constant 1 : i32
    %134 = arith.cmpi eq, %arg1, %c1_i32 : i32
    %135 = arith.extui %134 : i1 to i32
    %c0_i32_68 = arith.constant 0 : i32
    %136 = arith.cmpi ne, %135, %c0_i32_68 : i32
    scf.if %136 {
      %137 = arith.truncf %132 : vector<8x128xf32> to vector<8x128xbf16>
      %c0_69 = arith.constant 0 : index
      %c0_70 = arith.constant 0 : index
      %138 = vector.load %arg18[%c0_69, %c0_70] : memref<128x128xbf16, #tpu.memory_space<vmem>>, vector<128x128xbf16>
      %cst_71 = arith.constant dense<0.000000e+00> : vector<8x128xf32>
      %139 = tpu.matmul %137, %138, %cst_71 {dimension_numbers = #tpu.dot_dimension_numbers<[1], [0], [0], [1], [0, 0, 1, 1], [], []>} : vector<8x128xbf16>, vector<128x128xbf16>, vector<8x128xf32> -> vector<8x128xf32>
      %c0_72 = arith.constant 0 : index
      %c0_73 = arith.constant 0 : index
      %140 = vector.load %arg19[%c0_72, %c0_73] : memref<1x128xf32, #tpu.memory_space<vmem>>, vector<1x128xf32>
      %141 = vector.broadcast %140 : vector<1x128xf32> to vector<8x128xf32>
      %142 = arith.addf %139, %141 : vector<8x128xf32>
      %143 = math.tanh %142 : vector<8x128xf32>
      %144 = arith.truncf %143 : vector<8x128xf32> to vector<8x128xbf16>
      %c0_74 = arith.constant 0 : index
      %c0_75 = arith.constant 0 : index
      %145 = vector.load %arg20[%c0_74, %c0_75] : memref<128x128xbf16, #tpu.memory_space<vmem>>, vector<128x128xbf16>
      %cst_76 = arith.constant dense<0.000000e+00> : vector<8x128xf32>
      %146 = tpu.matmul %144, %145, %cst_76 {dimension_numbers = #tpu.dot_dimension_numbers<[1], [0], [0], [1], [0, 0, 1, 1], [], []>} : vector<8x128xbf16>, vector<128x128xbf16>, vector<8x128xf32> -> vector<8x128xf32>
      %c0_77 = arith.constant 0 : index
      %c0_78 = arith.constant 0 : index
      %147 = vector.load %arg21[%c0_77, %c0_78] : memref<1x128xf32, #tpu.memory_space<vmem>>, vector<1x128xf32>
      %148 = vector.broadcast %147 : vector<1x128xf32> to vector<8x128xf32>
      %149 = arith.addf %146, %148 : vector<8x128xf32>
      %c0_79 = arith.constant 0 : index
      %c0_80 = arith.constant 0 : index
      %150 = vector.load %arg22[%c0_79, %c0_80] : memref<8x128xf32, #tpu.memory_space<vmem>>, vector<8x128xf32>
      tpu.vector_store %arg22[%c0_79, %c0_80], %149 {strides = array<i32>} : memref<8x128xf32, #tpu.memory_space<vmem>>, vector<8x128xf32>,
    } else {
    }
    return
  }
  func.func @transform_0(%arg0: i32, %arg1: i32) -> (i32, i32) {
    %c0_i32 = arith.constant 0 : i32
    %c0_i32_0 = arith.constant 0 : i32
    return %arg0, %c0_i32 : i32, i32
  }
  func.func @transform_1(%arg0: i32, %arg1: i32) -> (i32, i32, i32) {
    %c0_i32 = arith.constant 0 : i32
    %c0_i32_0 = arith.constant 0 : i32
    %c0_i32_1 = arith.constant 0 : i32
    return %arg0, %c0_i32, %c0_i32_0 : i32, i32, i32
  }
  func.func @transform_2(%arg0: i32, %arg1: i32) -> (i32, i32) {
    %c0_i32 = arith.constant 0 : i32
    %c0_i32_0 = arith.constant 0 : i32
    %c0_i32_1 = arith.constant 0 : i32
    return %c0_i32, %c0_i32_0 : i32, i32
  }
  func.func @transform_3(%arg0: i32, %arg1: i32) -> (i32, i32) {
    %c0_i32 = arith.constant 0 : i32
    %c0_i32_0 = arith.constant 0 : i32
    %c0_i32_1 = arith.constant 0 : i32
    return %c0_i32, %c0_i32_0 : i32, i32
  }
  func.func @transform_4(%arg0: i32, %arg1: i32) -> (i32, i32, i32) {
    %c0_i32 = arith.constant 0 : i32
    %c0_i32_0 = arith.constant 0 : i32
    %c0_i32_1 = arith.constant 0 : i32
    return %arg1, %c0_i32, %c0_i32_0 : i32, i32, i32
  }
  func.func @transform_5(%arg0: i32, %arg1: i32) -> (i32, i32, i32) {
    %c0_i32 = arith.constant 0 : i32
    %c0_i32_0 = arith.constant 0 : i32
    %c0_i32_1 = arith.constant 0 : i32
    return %arg1, %c0_i32, %c0_i32_0 : i32, i32, i32
  }
  func.func @transform_6(%arg0: i32, %arg1: i32) -> (i32, i32, i32) {
    %c0_i32 = arith.constant 0 : i32
    %c0_i32_0 = arith.constant 0 : i32
    %c0_i32_1 = arith.constant 0 : i32
    return %arg1, %c0_i32, %c0_i32_0 : i32, i32, i32
  }
  func.func @transform_7(%arg0: i32, %arg1: i32) -> (i32, i32, i32) {
    %c0_i32 = arith.constant 0 : i32
    %c0_i32_0 = arith.constant 0 : i32
    %c0_i32_1 = arith.constant 0 : i32
    return %arg1, %c0_i32, %c0_i32_0 : i32, i32, i32
  }
  func.func @transform_8(%arg0: i32, %arg1: i32) -> (i32, i32, i32) {
    %c0_i32 = arith.constant 0 : i32
    %c0_i32_0 = arith.constant 0 : i32
    %c0_i32_1 = arith.constant 0 : i32
    return %arg1, %c0_i32, %c0_i32_0 : i32, i32, i32
  }
  func.func @transform_9(%arg0: i32, %arg1: i32) -> (i32, i32, i32) {
    %c0_i32 = arith.constant 0 : i32
    %c0_i32_0 = arith.constant 0 : i32
    %c0_i32_1 = arith.constant 0 : i32
    return %arg1, %c0_i32, %c0_i32_0 : i32, i32, i32
  }
  func.func @transform_10(%arg0: i32, %arg1: i32) -> (i32, i32, i32) {
    %c0_i32 = arith.constant 0 : i32
    %c0_i32_0 = arith.constant 0 : i32
    %c0_i32_1 = arith.constant 0 : i32
    return %arg1, %c0_i32, %c0_i32_0 : i32, i32, i32
  }
  func.func @transform_11(%arg0: i32, %arg1: i32) -> (i32, i32, i32) {
    %c0_i32 = arith.constant 0 : i32
    %c0_i32_0 = arith.constant 0 : i32
    %c0_i32_1 = arith.constant 0 : i32
    return %arg1, %c0_i32, %c0_i32_0 : i32, i32, i32
  }
  func.func @transform_12(%arg0: i32, %arg1: i32) -> (i32, i32, i32) {
    %c0_i32 = arith.constant 0 : i32
    %c0_i32_0 = arith.constant 0 : i32
    %c0_i32_1 = arith.constant 0 : i32
    return %arg1, %c0_i32, %c0_i32_0 : i32, i32, i32
  }
  func.func @transform_13(%arg0: i32, %arg1: i32) -> (i32, i32, i32) {
    %c0_i32 = arith.constant 0 : i32
    %c0_i32_0 = arith.constant 0 : i32
    %c0_i32_1 = arith.constant 0 : i32
    return %arg1, %c0_i32, %c0_i32_0 : i32, i32, i32
  }
  func.func @transform_14(%arg0: i32, %arg1: i32) -> (i32, i32, i32) {
    %c0_i32 = arith.constant 0 : i32
    %c0_i32_0 = arith.constant 0 : i32
    %c0_i32_1 = arith.constant 0 : i32
    return %arg1, %c0_i32, %c0_i32_0 : i32, i32, i32
  }
  func.func @transform_15(%arg0: i32, %arg1: i32) -> (i32, i32, i32) {
    %c0_i32 = arith.constant 0 : i32
    %c0_i32_0 = arith.constant 0 : i32
    %c0_i32_1 = arith.constant 0 : i32
    return %arg1, %c0_i32, %c0_i32_0 : i32, i32, i32
  }
  func.func @transform_16(%arg0: i32, %arg1: i32) -> (i32, i32) {
    %c0_i32 = arith.constant 0 : i32
    %c0_i32_0 = arith.constant 0 : i32
    %c0_i32_1 = arith.constant 0 : i32
    return %c0_i32, %c0_i32_0 : i32, i32
  }
  func.func @transform_17(%arg0: i32, %arg1: i32) -> (i32, i32) {
    %c0_i32 = arith.constant 0 : i32
    %c0_i32_0 = arith.constant 0 : i32
    %c0_i32_1 = arith.constant 0 : i32
    return %c0_i32, %c0_i32_0 : i32, i32
  }
  func.func @transform_18(%arg0: i32, %arg1: i32) -> (i32, i32) {
    %c0_i32 = arith.constant 0 : i32
    %c0_i32_0 = arith.constant 0 : i32
    %c0_i32_1 = arith.constant 0 : i32
    return %c0_i32, %c0_i32_0 : i32, i32
  }
  func.func @transform_19(%arg0: i32, %arg1: i32) -> (i32, i32) {
    %c0_i32 = arith.constant 0 : i32
    %c0_i32_0 = arith.constant 0 : i32
    %c0_i32_1 = arith.constant 0 : i32
    return %c0_i32, %c0_i32_0 : i32, i32
  }
  func.func @transform_20(%arg0: i32, %arg1: i32) -> (i32, i32) {
    %c0_i32 = arith.constant 0 : i32
    %c0_i32_0 = arith.constant 0 : i32
    return %arg0, %c0_i32 : i32, i32
  }
}

</mosaic_0001>

<llo_original>
// kernel: bert_sentiment_forward.1
$region0: #{bert_sentiment_forward.1}
  #allocation0 [shape = 'u32[]', space=smem, size = 0x4, offset = 0x4, fixed_abs, tag = 'smem constant byte address 0x4 - core index']
  #allocation1 [shape = 'u32[144,128]{1,0:T(1,128)}', space=vmem, size = 0x12000, scoped, tag = 'internal scratch']
  #allocation2 [shape = 'f32[8,128]{1,0:T(8,128)}', space=vmem, size = 0x1000, scoped, tag = 'scratch operand']
  %s0 = inlined_call_operand.vmem [shape: f32[16,128], index: 0, kind: input, shape index: {}]
  %s1 = inlined_call_operand.vmem [shape: f32[2,16,8], index: 1, kind: input, shape index: {}]
  %s2 = inlined_call_operand.hbm [shape: f32[1,128], index: 2, kind: input, shape index: {}]
  %s3 = inlined_call_operand.hbm [shape: f32[1,128], index: 3, kind: input, shape index: {}]
  %s4 = inlined_call_operand.vmem [shape: bf16[2,128,384], index: 4, kind: input, shape index: {}]
  %s5 = inlined_call_operand.vmem [shape: f32[2,1,384], index: 5, kind: input, shape index: {}]
  %s6 = inlined_call_operand.hbm [shape: bf16[2,128,128], index: 6, kind: input, shape index: {}]
  %s7 = inlined_call_operand.hbm [shape: f32[2,1,128], index: 7, kind: input, shape index: {}]
  %s8 = inlined_call_operand.hbm [shape: f32[2,1,128], index: 8, kind: input, shape index: {}]
  %s9 = inlined_call_operand.hbm [shape: f32[2,1,128], index: 9, kind: input, shape index: {}]
  %s10 = inlined_call_operand.hbm [shape: bf16[2,128,256], index: 10, kind: input, shape index: {}]
  %s11 = inlined_call_operand.hbm [shape: f32[2,1,256], index: 11, kind: input, shape index: {}]
  %s12 = inlined_call_operand.hbm [shape: bf16[2,256,128], index: 12, kind: input, shape index: {}]
  %s13 = inlined_call_operand.hbm [shape: f32[2,1,128], index: 13, kind: input, shape index: {}]
  %s14 = inlined_call_operand.hbm [shape: f32[2,1,128], index: 14, kind: input, shape index: {}]
  %s15 = inlined_call_operand.hbm [shape: f32[2,1,128], index: 15, kind: input, shape index: {}]
  %s16 = inlined_call_operand.vmem [shape: bf16[128,128], index: 16, kind: input, shape index: {}]
  %s17 = inlined_call_operand.vmem [shape: f32[1,128], index: 17, kind: input, shape index: {}]
  %s18 = inlined_call_operand.hbm [shape: bf16[128,128], index: 18, kind: input, shape index: {}]
  %s19 = inlined_call_operand.hbm [shape: f32[1,128], index: 19, kind: input, shape index: {}]
  %s20 = inlined_call_operand.vmem [shape: f32[16,128], index: 20, kind: output, shape index: {}]
  %s21 = sld [smem:[#allocation0]]
  $region177: #{bert_sentiment_forward.1} parent=0
    _
  %s23 = ssub.s32 1, %s21
  %s24 = scalar_select 0, %s23, %s21
  $region1: #{bert_sentiment_forward.1} parent=0
    #allocation3 [shape = 'u8[512]{0}', space=vmem, size = 0x400, scoped, tag = 'input window, operand 2, single buffered']
    #allocation4 [shape = 's32[2]{0}', space=sflag, size = 0x8, scoped, tag = 'scoped memory for bert_sentiment_forward.1']
    #allocation5 [shape = 'u8[512]{0}', space=vmem, size = 0x400, scoped, tag = 'input window, operand 3, single buffered']
    #allocation6 [shape = 's32[1]{0}', space=sflag, size = 0x4, scoped, tag = 'scoped memory for bert_sentiment_forward.1']
    #allocation7 [shape = 'u8[65536]{0}', space=vmem, size = 0x10000, scoped, tag = 'input window, operand 6']
    #allocation8 [shape = 'u8[1024]{0}', space=vmem, size = 0x400, scoped, tag = 'input window, operand 7']
    #allocation9 [shape = 'u8[1024]{0}', space=vmem, size = 0x400, scoped, tag = 'input window, operand 8']
    #allocation10 [shape = 'u8[1024]{0}', space=vmem, size = 0x400, scoped, tag = 'input window, operand 9']
    #allocation11 [shape = 'u8[131072]{0}', space=vmem, size = 0x20000, scoped, tag = 'input window, operand 10']
    #allocation12 [shape = 'u8[2048]{0}', space=vmem, size = 0x800, scoped, tag = 'input window, operand 11']
    #allocation13 [shape = 'u8[131072]{0}', space=vmem, size = 0x20000, scoped, tag = 'input window, operand 12']
    #allocation14 [shape = 'u8[1024]{0}', space=vmem, size = 0x400, scoped, tag = 'input window, operand 13']
    #allocation15 [shape = 'u8[1024]{0}', space=vmem, size = 0x400, scoped, tag = 'input window, operand 14']
    #allocation16 [shape = 'u8[1024]{0}', space=vmem, size = 0x400, scoped, tag = 'input window, operand 15']
    #allocation17 [shape = 'u8[32768]{0}', space=vmem, size = 0x8000, scoped, tag = 'input window, operand 18, single buffered']
    #allocation18 [shape = 'u8[512]{0}', space=vmem, size = 0x400, scoped, tag = 'input window, operand 19, single buffered']
    #allocation19 [shape = 's32[1]{0}', space=sflag, size = 0x4, scoped, tag = 'scoped memory for bert_sentiment_forward.1']
    %25 = vsyncpa [#allocation4], 0
    %26 = vsyncpa [#allocation6], 0
    %27 = vsyncpa [#allocation19], 0
    loop: start=0, step=1, limit=6
    $region2: #{bert_sentiment_forward.1} parent=1 // loop_pre_header
      _
    $region3: #{bert_sentiment_forward.1} parent=1 // loop_header
      %s29 = sphi 0, %s33
      %p30 = scmp.ge.s32.totalorder %s29, 6
      %s36 = sphi 0, %s48
      %s37 = sphi 0, %s44
      %s38 = sphi 0, %s36
      %s39 = sphi 0, %s37
      %s40 = sphi 0, %s38
      %s41 = sphi 0, %s39
      %s51 = sphi 0, %s53
      %s54 = sphi 0, %s51
      %s55 = sphi 0, %s54
      %s71 = sphi 0, %s55
      %s77 = sphi 0, %s79
      %s80 = sphi 0, %s77
      %s81 = sphi 0, %s80
      %s97 = sphi 0, %s81
      %s101 = sphi 0, %s101
      %s103 = sphi 0, %s101
      %s104 = sphi 0, %s103
      %s118 = sphi 0, %s104
      %s122 = sphi 0, %s122
      %s124 = sphi 0, %s122
      %s125 = sphi 0, %s124
      %s139 = sphi 0, %s125
      %s145 = sphi 0, %s147
      %s148 = sphi 0, %s145
      %s149 = sphi 0, %s148
      %s165 = sphi 0, %s149
      %s171 = sphi 0, %s173
      %s174 = sphi 0, %s171
      %s175 = sphi 0, %s174
      %s191 = sphi 0, %s175
      %s197 = sphi 0, %s199
      %s200 = sphi 0, %s197
      %s201 = sphi 0, %s200
      %s217 = sphi 0, %s201
      %s223 = sphi 0, %s225
      %s226 = sphi 0, %s223
      %s227 = sphi 0, %s226
      %s243 = sphi 0, %s227
      %s249 = sphi 0, %s251
      %s252 = sphi 0, %s249
      %s253 = sphi 0, %s252
      %s269 = sphi 0, %s253
      %s275 = sphi 0, %s277
      %s278 = sphi 0, %s275
      %s279 = sphi 0, %s278
      %s295 = sphi 0, %s279
      %s301 = sphi 0, %s303
      %s304 = sphi 0, %s301
      %s305 = sphi 0, %s304
      %s321 = sphi 0, %s305
      %s327 = sphi 0, %s329
      %s330 = sphi 0, %s327
      %s331 = sphi 0, %s330
      %s347 = sphi 0, %s331
      %s353 = sphi 0, %s355
      %s356 = sphi 0, %s353
      %s357 = sphi 0, %s356
      %s373 = sphi 0, %s357
      %s379 = sphi 0, %s381
      %s382 = sphi 0, %s379
      %s383 = sphi 0, %s382
      %s399 = sphi 0, %s383
      %s405 = sphi 0, %s407
      %s408 = sphi 0, %s405
      %s409 = sphi 0, %s408
      %s425 = sphi 0, %s409
      %s431 = sphi 0, %s433
      %s434 = sphi 0, %s431
      %s435 = sphi 0, %s434
      %s451 = sphi 0, %s435
      %s455 = sphi 0, %s455
      %s457 = sphi 0, %s455
      %s458 = sphi 0, %s457
      %s472 = sphi 0, %s458
      %s476 = sphi 0, %s476
      %s478 = sphi 0, %s476
      %s479 = sphi 0, %s478
      %s493 = sphi 0, %s479
      %s497 = sphi 0, %s497
      %s499 = sphi 0, %s497
      %s500 = sphi 0, %s499
      %s514 = sphi 0, %s500
      %s518 = sphi 0, %s518
      %s520 = sphi 0, %s518
      %s521 = sphi 0, %s520
      %s535 = sphi 0, %s521
      %s541 = sphi 0, %s543
      %s544 = sphi 0, %s541
      %s545 = sphi 0, %s544
      %s561 = sphi 0, %s545
    $region4: #{bert_sentiment_forward.1} parent=1 // loop_header_branch
      %32 = sbr.rel (%p30) target = $region8
    $region5: #{bert_sentiment_forward.1} parent=1 // loop_body
      %s34 = ssub.s32 %s29, 1
      %s35 = ssub.s32 %s29, 2
      %s42 = sadd.s32 1, %s37
      %p43 = scmp.ge.s32.totalorder %s42, 2
      %s44 = scalar_select %p43, 0, %s42
      %s45 = sadd.s32 1, %s36
      %s46 = scalar_select %p43, %s45, %s36
      %p47 = scmp.ge.s32.totalorder %s46, 2
      %s48 = scalar_select %p47, 0, %s46
      %s49 = ssub.s32 %s36, %s48
      %p50 = scmp.eq.s32.totalorder %s49, 0
      %s52 = sadd.s32 %s51, 1
      %s53 = scalar_select %p50, %s51, %s52
      %p56 = pneg %p50
      %p57 = scmp.eq.s32.totalorder %s29, 3
      %p58 = por %p56, %p57
      %p59 = scmp.ne.s32.totalorder %s51, %s54
      %p60 = scmp.eq.s32.totalorder %s29, 0
      %p61 = por %p59, %p60
      %p62 = scmp.ne.s32.totalorder %s51, %s54
      %p63 = scmp.eq.s32.totalorder %s34, 3
      %p64 = por %p62, %p63
      %p65 = scmp.ne.s32.totalorder %s54, %s55
      %p66 = scmp.eq.s32.totalorder %s34, 0
      %p67 = por %p65, %p66
      %p68 = scmp.ne.s32.totalorder %s54, %s55
      %p69 = scmp.eq.s32.totalorder %s35, 3
      %p70 = por %p68, %p69
      %p72 = scmp.ne.s32.totalorder %s55, %s71
      %p73 = scmp.eq.s32.totalorder %s35, 0
      %p74 = por %p72, %p73
      %s75 = ssub.s32 %s36, %s48
      %p76 = scmp.eq.s32.totalorder %s75, 0
      %s78 = sadd.s32 %s77, 1
      %s79 = scalar_select %p76, %s77, %s78
      %p82 = pneg %p76
      %p83 = scmp.eq.s32.totalorder %s29, 3
      %p84 = por %p82, %p83
      %p85 = scmp.ne.s32.totalorder %s77, %s80
      %p86 = scmp.eq.s32.totalorder %s29, 0
      %p87 = por %p85, %p86
      %p88 = scmp.ne.s32.totalorder %s77, %s80
      %p89 = scmp.eq.s32.totalorder %s34, 3
      %p90 = por %p88, %p89
      %p91 = scmp.ne.s32.totalorder %s80, %s81
      %p92 = scmp.eq.s32.totalorder %s34, 0
      %p93 = por %p91, %p92
      %p94 = scmp.ne.s32.totalorder %s80, %s81
      %p95 = scmp.eq.s32.totalorder %s35, 3
      %p96 = por %p94, %p95
      %p98 = scmp.ne.s32.totalorder %s81, %s97
      %p99 = scmp.eq.s32.totalorder %s35, 0
      %p100 = por %p98, %p99
      %s102 = sadd.s32 %s101, 1
      %p105 = scmp.eq.s32.totalorder %s29, 3
      %p106 = scmp.ne.s32.totalorder %s101, %s103
      %p107 = scmp.eq.s32.totalorder %s29, 0
      %p108 = por %p106, %p107
      %p109 = scmp.ne.s32.totalorder %s101, %s103
      %p110 = scmp.eq.s32.totalorder %s34, 3
      %p111 = por %p109, %p110
      %p112 = scmp.ne.s32.totalorder %s103, %s104
      %p113 = scmp.eq.s32.totalorder %s34, 0
      %p114 = por %p112, %p113
      %p115 = scmp.ne.s32.totalorder %s103, %s104
      %p116 = scmp.eq.s32.totalorder %s35, 3
      %p117 = por %p115, %p116
      %p119 = scmp.ne.s32.totalorder %s104, %s118
      %p120 = scmp.eq.s32.totalorder %s35, 0
      %p121 = por %p119, %p120
      %s123 = sadd.s32 %s122, 1
      %p126 = scmp.eq.s32.totalorder %s29, 3
      %p127 = scmp.ne.s32.totalorder %s122, %s124
      %p128 = scmp.eq.s32.totalorder %s29, 0
      %p129 = por %p127, %p128
      %p130 = scmp.ne.s32.totalorder %s122, %s124
      %p131 = scmp.eq.s32.totalorder %s34, 3
      %p132 = por %p130, %p131
      %p133 = scmp.ne.s32.totalorder %s124, %s125
      %p134 = scmp.eq.s32.totalorder %s34, 0
      %p135 = por %p133, %p134
      %p136 = scmp.ne.s32.totalorder %s124, %s125
      %p137 = scmp.eq.s32.totalorder %s35, 3
      %p138 = por %p136, %p137
      %p140 = scmp.ne.s32.totalorder %s125, %s139
      %p141 = scmp.eq.s32.totalorder %s35, 0
      %p142 = por %p140, %p141
      %s143 = ssub.s32 %s37, %s44
      %p144 = scmp.eq.s32.totalorder %s143, 0
      %s146 = sadd.s32 %s145, 1
      %s147 = scalar_select %p144, %s145, %s146
      %p150 = pneg %p144
      %p151 = scmp.eq.s32.totalorder %s29, 3
      %p152 = por %p150, %p151
      %p153 = scmp.ne.s32.totalorder %s145, %s148
      %p154 = scmp.eq.s32.totalorder %s29, 0
      %p155 = por %p153, %p154
      %p156 = scmp.ne.s32.totalorder %s145, %s148
      %p157 = scmp.eq.s32.totalorder %s34, 3
      %p158 = por %p156, %p157
      %p159 = scmp.ne.s32.totalorder %s148, %s149
      %p160 = scmp.eq.s32.totalorder %s34, 0
      %p161 = por %p159, %p160
      %p162 = scmp.ne.s32.totalorder %s148, %s149
      %p163 = scmp.eq.s32.totalorder %s35, 3
      %p164 = por %p162, %p163
      %p166 = scmp.ne.s32.totalorder %s149, %s165
      %p167 = scmp.eq.s32.totalorder %s35, 0
      %p168 = por %p166, %p167
      %s169 = ssub.s32 %s37, %s44
      %p170 = scmp.eq.s32.totalorder %s169, 0
      %s172 = sadd.s32 %s171, 1
      %s173 = scalar_select %p170, %s171, %s172
      %p176 = pneg %p170
      %p177 = scmp.eq.s32.totalorder %s29, 3
      %p178 = por %p176, %p177
      %p179 = scmp.ne.s32.totalorder %s171, %s174
      %p180 = scmp.eq.s32.totalorder %s29, 0
      %p181 = por %p179, %p180
      %p182 = scmp.ne.s32.totalorder %s171, %s174
      %p183 = scmp.eq.s32.totalorder %s34, 3
      %p184 = por %p182, %p183
      %p185 = scmp.ne.s32.totalorder %s174, %s175
      %p186 = scmp.eq.s32.totalorder %s34, 0
      %p187 = por %p185, %p186
      %p188 = scmp.ne.s32.totalorder %s174, %s175
      %p189 = scmp.eq.s32.totalorder %s35, 3
      %p190 = por %p188, %p189
      %p192 = scmp.ne.s32.totalorder %s175, %s191
      %p193 = scmp.eq.s32.totalorder %s35, 0
      %p194 = por %p192, %p193
      %s195 = ssub.s32 %s37, %s44
      %p196 = scmp.eq.s32.totalorder %s195, 0
      %s198 = sadd.s32 %s197, 1
      %s199 = scalar_select %p196, %s197, %s198
      %p202 = pneg %p196
      %p203 = scmp.eq.s32.totalorder %s29, 3
      %p204 = por %p202, %p203
      %p205 = scmp.ne.s32.totalorder %s197, %s200
      %p206 = scmp.eq.s32.totalorder %s29, 0
      %p207 = por %p205, %p206
      %p208 = scmp.ne.s32.totalorder %s197, %s200
      %p209 = scmp.eq.s32.totalorder %s34, 3
      %p210 = por %p208, %p209
      %p211 = scmp.ne.s32.totalorder %s200, %s201
      %p212 = scmp.eq.s32.totalorder %s34, 0
      %p213 = por %p211, %p212
      %p214 = scmp.ne.s32.totalorder %s200, %s201
      %p215 = scmp.eq.s32.totalorder %s35, 3
      %p216 = por %p214, %p215
      %p218 = scmp.ne.s32.totalorder %s201, %s217
      %p219 = scmp.eq.s32.totalorder %s35, 0
      %p220 = por %p218, %p219
      %s221 = ssub.s32 %s37, %s44
      %p222 = scmp.eq.s32.totalorder %s221, 0
      %s224 = sadd.s32 %s223, 1
      %s225 = scalar_select %p222, %s223, %s224
      %p228 = pneg %p222
      %p229 = scmp.eq.s32.totalorder %s29, 3
      %p230 = por %p228, %p229
      %p231 = scmp.ne.s32.totalorder %s223, %s226
      %p232 = scmp.eq.s32.totalorder %s29, 0
      %p233 = por %p231, %p232
      %p234 = scmp.ne.s32.totalorder %s223, %s226
      %p235 = scmp.eq.s32.totalorder %s34, 3
      %p236 = por %p234, %p235
      %p237 = scmp.ne.s32.totalorder %s226, %s227
      %p238 = scmp.eq.s32.totalorder %s34, 0
      %p239 = por %p237, %p238
      %p240 = scmp.ne.s32.totalorder %s226, %s227
      %p241 = scmp.eq.s32.totalorder %s35, 3
      %p242 = por %p240, %p241
      %p244 = scmp.ne.s32.totalorder %s227, %s243
      %p245 = scmp.eq.s32.totalorder %s35, 0
      %p246 = por %p244, %p245
      %s247 = ssub.s32 %s37, %s44
      %p248 = scmp.eq.s32.totalorder %s247, 0
      %s250 = sadd.s32 %s249, 1
      %s251 = scalar_select %p248, %s249, %s250
      %p254 = pneg %p248
      %p255 = scmp.eq.s32.totalorder %s29, 3
      %p256 = por %p254, %p255
      %p257 = scmp.ne.s32.totalorder %s249, %s252
      %p258 = scmp.eq.s32.totalorder %s29, 0
      %p259 = por %p257, %p258
      %p260 = scmp.ne.s32.totalorder %s249, %s252
      %p261 = scmp.eq.s32.totalorder %s34, 3
      %p262 = por %p260, %p261
      %p263 = scmp.ne.s32.totalorder %s252, %s253
      %p264 = scmp.eq.s32.totalorder %s34, 0
      %p265 = por %p263, %p264
      %p266 = scmp.ne.s32.totalorder %s252, %s253
      %p267 = scmp.eq.s32.totalorder %s35, 3
      %p268 = por %p266, %p267
      %p270 = scmp.ne.s32.totalorder %s253, %s269
      %p271 = scmp.eq.s32.totalorder %s35, 0
      %p272 = por %p270, %p271
      %s273 = ssub.s32 %s37, %s44
      %p274 = scmp.eq.s32.totalorder %s273, 0
      %s276 = sadd.s32 %s275, 1
      %s277 = scalar_select %p274, %s275, %s276
      %p280 = pneg %p274
      %p281 = scmp.eq.s32.totalorder %s29, 3
      %p282 = por %p280, %p281
      %p283 = scmp.ne.s32.totalorder %s275, %s278
      %p284 = scmp.eq.s32.totalorder %s29, 0
      %p285 = por %p283, %p284
      %p286 = scmp.ne.s32.totalorder %s275, %s278
      %p287 = scmp.eq.s32.totalorder %s34, 3
      %p288 = por %p286, %p287
      %p289 = scmp.ne.s32.totalorder %s278, %s279
      %p290 = scmp.eq.s32.totalorder %s34, 0
      %p291 = por %p289, %p290
      %p292 = scmp.ne.s32.totalorder %s278, %s279
      %p293 = scmp.eq.s32.totalorder %s35, 3
      %p294 = por %p292, %p293
      %p296 = scmp.ne.s32.totalorder %s279, %s295
      %p297 = scmp.eq.s32.totalorder %s35, 0
      %p298 = por %p296, %p297
      %s299 = ssub.s32 %s37, %s44
      %p300 = scmp.eq.s32.totalorder %s299, 0
      %s302 = sadd.s32 %s301, 1
      %s303 = scalar_select %p300, %s301, %s302
      %p306 = pneg %p300
      %p307 = scmp.eq.s32.totalorder %s29, 3
      %p308 = por %p306, %p307
      %p309 = scmp.ne.s32.totalorder %s301, %s304
      %p310 = scmp.eq.s32.totalorder %s29, 0
      %p311 = por %p309, %p310
      %p312 = scmp.ne.s32.totalorder %s301, %s304
      %p313 = scmp.eq.s32.totalorder %s34, 3
      %p314 = por %p312, %p313
      %p315 = scmp.ne.s32.totalorder %s304, %s305
      %p316 = scmp.eq.s32.totalorder %s34, 0
      %p317 = por %p315, %p316
      %p318 = scmp.ne.s32.totalorder %s304, %s305
      %p319 = scmp.eq.s32.totalorder %s35, 3
      %p320 = por %p318, %p319
      %p322 = scmp.ne.s32.totalorder %s305, %s321
      %p323 = scmp.eq.s32.totalorder %s35, 0
      %p324 = por %p322, %p323
      %s325 = ssub.s32 %s37, %s44
      %p326 = scmp.eq.s32.totalorder %s325, 0
      %s328 = sadd.s32 %s327, 1
      %s329 = scalar_select %p326, %s327, %s328
      %p332 = pneg %p326
      %p333 = scmp.eq.s32.totalorder %s29, 3
      %p334 = por %p332, %p333
      %p335 = scmp.ne.s32.totalorder %s327, %s330
      %p336 = scmp.eq.s32.totalorder %s29, 0
      %p337 = por %p335, %p336
      %p338 = scmp.ne.s32.totalorder %s327, %s330
      %p339 = scmp.eq.s32.totalorder %s34, 3
      %p340 = por %p338, %p339
      %p341 = scmp.ne.s32.totalorder %s330, %s331
      %p342 = scmp.eq.s32.totalorder %s34, 0
      %p343 = por %p341, %p342
      %p344 = scmp.ne.s32.totalorder %s330, %s331
      %p345 = scmp.eq.s32.totalorder %s35, 3
      %p346 = por %p344, %p345
      %p348 = scmp.ne.s32.totalorder %s331, %s347
      %p349 = scmp.eq.s32.totalorder %s35, 0
      %p350 = por %p348, %p349
      %s351 = ssub.s32 %s37, %s44
      %p352 = scmp.eq.s32.totalorder %s351, 0
      %s354 = sadd.s32 %s353, 1
      %s355 = scalar_select %p352, %s353, %s354
      %p358 = pneg %p352
      %p359 = scmp.eq.s32.totalorder %s29, 3
      %p360 = por %p358, %p359
      %p361 = scmp.ne.s32.totalorder %s353, %s356
      %p362 = scmp.eq.s32.totalorder %s29, 0
      %p363 = por %p361, %p362
      %p364 = scmp.ne.s32.totalorder %s353, %s356
      %p365 = scmp.eq.s32.totalorder %s34, 3
      %p366 = por %p364, %p365
      %p367 = scmp.ne.s32.totalorder %s356, %s357
      %p368 = scmp.eq.s32.totalorder %s34, 0
      %p369 = por %p367, %p368
      %p370 = scmp.ne.s32.totalorder %s356, %s357
      %p371 = scmp.eq.s32.totalorder %s35, 3
      %p372 = por %p370, %p371
      %p374 = scmp.ne.s32.totalorder %s357, %s373
      %p375 = scmp.eq.s32.totalorder %s35, 0
      %p376 = por %p374, %p375
      %s377 = ssub.s32 %s37, %s44
      %p378 = scmp.eq.s32.totalorder %s377, 0
      %s380 = sadd.s32 %s379, 1
      %s381 = scalar_select %p378, %s379, %s380
      %p384 = pneg %p378
      %p385 = scmp.eq.s32.totalorder %s29, 3
      %p386 = por %p384, %p385
      %p387 = scmp.ne.s32.totalorder %s379, %s382
      %p388 = scmp.eq.s32.totalorder %s29, 0
      %p389 = por %p387, %p388
      %p390 = scmp.ne.s32.totalorder %s379, %s382
      %p391 = scmp.eq.s32.totalorder %s34, 3
      %p392 = por %p390, %p391
      %p393 = scmp.ne.s32.totalorder %s382, %s383
      %p394 = scmp.eq.s32.totalorder %s34, 0
      %p395 = por %p393, %p394
      %p396 = scmp.ne.s32.totalorder %s382, %s383
      %p397 = scmp.eq.s32.totalorder %s35, 3
      %p398 = por %p396, %p397
      %p400 = scmp.ne.s32.totalorder %s383, %s399
      %p401 = scmp.eq.s32.totalorder %s35, 0
      %p402 = por %p400, %p401
      %s403 = ssub.s32 %s37, %s44
      %p404 = scmp.eq.s32.totalorder %s403, 0
      %s406 = sadd.s32 %s405, 1
      %s407 = scalar_select %p404, %s405, %s406
      %p410 = pneg %p404
      %p411 = scmp.eq.s32.totalorder %s29, 3
      %p412 = por %p410, %p411
      %p413 = scmp.ne.s32.totalorder %s405, %s408
      %p414 = scmp.eq.s32.totalorder %s29, 0
      %p415 = por %p413, %p414
      %p416 = scmp.ne.s32.totalorder %s405, %s408
      %p417 = scmp.eq.s32.totalorder %s34, 3
      %p418 = por %p416, %p417
      %p419 = scmp.ne.s32.totalorder %s408, %s409
      %p420 = scmp.eq.s32.totalorder %s34, 0
      %p421 = por %p419, %p420
      %p422 = scmp.ne.s32.totalorder %s408, %s409
      %p423 = scmp.eq.s32.totalorder %s35, 3
      %p424 = por %p422, %p423
      %p426 = scmp.ne.s32.totalorder %s409, %s425
      %p427 = scmp.eq.s32.totalorder %s35, 0
      %p428 = por %p426, %p427
      %s429 = ssub.s32 %s37, %s44
      %p430 = scmp.eq.s32.totalorder %s429, 0
      %s432 = sadd.s32 %s431, 1
      %s433 = scalar_select %p430, %s431, %s432
      %p436 = pneg %p430
      %p437 = scmp.eq.s32.totalorder %s29, 3
      %p438 = por %p436, %p437
      %p439 = scmp.ne.s32.totalorder %s431, %s434
      %p440 = scmp.eq.s32.totalorder %s29, 0
      %p441 = por %p439, %p440
      %p442 = scmp.ne.s32.totalorder %s431, %s434
      %p443 = scmp.eq.s32.totalorder %s34, 3
      %p444 = por %p442, %p443
      %p445 = scmp.ne.s32.totalorder %s434, %s435
      %p446 = scmp.eq.s32.totalorder %s34, 0
      %p447 = por %p445, %p446
      %p448 = scmp.ne.s32.totalorder %s434, %s435
      %p449 = scmp.eq.s32.totalorder %s35, 3
      %p450 = por %p448, %p449
      %p452 = scmp.ne.s32.totalorder %s435, %s451
      %p453 = scmp.eq.s32.totalorder %s35, 0
      %p454 = por %p452, %p453
      %s456 = sadd.s32 %s455, 1
      %p459 = scmp.eq.s32.totalorder %s29, 3
      %p460 = scmp.ne.s32.totalorder %s455, %s457
      %p461 = scmp.eq.s32.totalorder %s29, 0
      %p462 = por %p460, %p461
      %p463 = scmp.ne.s32.totalorder %s455, %s457
      %p464 = scmp.eq.s32.totalorder %s34, 3
      %p465 = por %p463, %p464
      %p466 = scmp.ne.s32.totalorder %s457, %s458
      %p467 = scmp.eq.s32.totalorder %s34, 0
      %p468 = por %p466, %p467
      %p469 = scmp.ne.s32.totalorder %s457, %s458
      %p470 = scmp.eq.s32.totalorder %s35, 3
      %p471 = por %p469, %p470
      %p473 = scmp.ne.s32.totalorder %s458, %s472
      %p474 = scmp.eq.s32.totalorder %s35, 0
      %p475 = por %p473, %p474
      %s477 = sadd.s32 %s476, 1
      %p480 = scmp.eq.s32.totalorder %s29, 3
      %p481 = scmp.ne.s32.totalorder %s476, %s478
      %p482 = scmp.eq.s32.totalorder %s29, 0
      %p483 = por %p481, %p482
      %p484 = scmp.ne.s32.totalorder %s476, %s478
      %p485 = scmp.eq.s32.totalorder %s34, 3
      %p486 = por %p484, %p485
      %p487 = scmp.ne.s32.totalorder %s478, %s479
      %p488 = scmp.eq.s32.totalorder %s34, 0
      %p489 = por %p487, %p488
      %p490 = scmp.ne.s32.totalorder %s478, %s479
      %p491 = scmp.eq.s32.totalorder %s35, 3
      %p492 = por %p490, %p491
      %p494 = scmp.ne.s32.totalorder %s479, %s493
      %p495 = scmp.eq.s32.totalorder %s35, 0
      %p496 = por %p494, %p495
      %s498 = sadd.s32 %s497, 1
      %p501 = scmp.eq.s32.totalorder %s29, 3
      %p502 = scmp.ne.s32.totalorder %s497, %s499
      %p503 = scmp.eq.s32.totalorder %s29, 0
      %p504 = por %p502, %p503
      %p505 = scmp.ne.s32.totalorder %s497, %s499
      %p506 = scmp.eq.s32.totalorder %s34, 3
      %p507 = por %p505, %p506
      %p508 = scmp.ne.s32.totalorder %s499, %s500
      %p509 = scmp.eq.s32.totalorder %s34, 0
      %p510 = por %p508, %p509
      %p511 = scmp.ne.s32.totalorder %s499, %s500
      %p512 = scmp.eq.s32.totalorder %s35, 3
      %p513 = por %p511, %p512
      %p515 = scmp.ne.s32.totalorder %s500, %s514
      %p516 = scmp.eq.s32.totalorder %s35, 0
      %p517 = por %p515, %p516
      %s519 = sadd.s32 %s518, 1
      %p522 = scmp.eq.s32.totalorder %s29, 3
      %p523 = scmp.ne.s32.totalorder %s518, %s520
      %p524 = scmp.eq.s32.totalorder %s29, 0
      %p525 = por %p523, %p524
      %p526 = scmp.ne.s32.totalorder %s518, %s520
      %p527 = scmp.eq.s32.totalorder %s34, 3
      %p528 = por %p526, %p527
      %p529 = scmp.ne.s32.totalorder %s520, %s521
      %p530 = scmp.eq.s32.totalorder %s34, 0
      %p531 = por %p529, %p530
      %p532 = scmp.ne.s32.totalorder %s520, %s521
      %p533 = scmp.eq.s32.totalorder %s35, 3
      %p534 = por %p532, %p533
      %p536 = scmp.ne.s32.totalorder %s521, %s535
      %p537 = scmp.eq.s32.totalorder %s35, 0
      %p538 = por %p536, %p537
      %s539 = ssub.s32 %s36, %s48
      %p540 = scmp.eq.s32.totalorder %s539, 0
      %s542 = sadd.s32 %s541, 1
      %s543 = scalar_select %p540, %s541, %s542
      %p546 = pneg %p540
      %p547 = scmp.eq.s32.totalorder %s29, 3
      %p548 = por %p546, %p547
      %p549 = scmp.ne.s32.totalorder %s541, %s544
      %p550 = scmp.eq.s32.totalorder %s29, 0
      %p551 = por %p549, %p550
      %p552 = scmp.ne.s32.totalorder %s541, %s544
      %p553 = scmp.eq.s32.totalorder %s34, 3
      %p554 = por %p552, %p553
      %p555 = scmp.ne.s32.totalorder %s544, %s545
      %p556 = scmp.eq.s32.totalorder %s34, 0
      %p557 = por %p555, %p556
      %p558 = scmp.ne.s32.totalorder %s544, %s545
      %p559 = scmp.eq.s32.totalorder %s35, 3
      %p560 = por %p558, %p559
      %p562 = scmp.ne.s32.totalorder %s545, %s561
      %p563 = scmp.eq.s32.totalorder %s35, 0
      %p564 = por %p562, %p563
      %p565 = scmp.le.s32.totalorder 1, %s29
      %p566 = scmp.lt.s32.totalorder %s29, 5
      %p567 = pnand %p565, %p566
      %p568 = pneg %p567
      // Predicated region
      $region9: #{bert_sentiment_forward.1} parent=5 // pred_check
        _
      $region10: #{bert_sentiment_forward.1} parent=5 // pred_check_branch
        %570 = sbr.rel (%p567) target = $region12
      $region11: #{bert_sentiment_forward.1} parent=5 // pred_region
        %s571 = ssub.s32 %s29, 1
        // Predicated region
        $region13: #{bert_sentiment_forward.1} parent=11 // pred_check
          %p572 = pneg %p114
        $region14: #{bert_sentiment_forward.1} parent=11 // pred_check_branch
          %574 = sbr.rel (%p572) target = $region16
        $region15: #{bert_sentiment_forward.1} parent=11 // pred_region
          %s576 = ssub.s32 16, 16
          %577 = vsyncadd [#allocation4], %s576
          %s579 = sshll.u32 [#allocation3], 4
          %s580 = int_to_ptr.vmem [resolvable:$true] %s579
          %582 = dma.hbm_to_vmem [thread:$0]  %s2, 16, %s580, [#allocation4]
        $region16: #{bert_sentiment_forward.1} parent=11 // pred_fallthru
          _
        // Predicated region
        $region17: #{bert_sentiment_forward.1} parent=11 // pred_check
          %p583 = pneg %p135
        $region18: #{bert_sentiment_forward.1} parent=11 // pred_check_branch
          %585 = sbr.rel (%p583) target = $region20
        $region19: #{bert_sentiment_forward.1} parent=11 // pred_region
          %s587 = ssub.s32 16, 16
          %588 = vsyncadd [#allocation6], %s587
          %s590 = sshll.u32 [#allocation5], 4
          %s591 = int_to_ptr.vmem [resolvable:$true] %s590
          %593 = dma.hbm_to_vmem [thread:$0]  %s3, 16, %s591, [#allocation6]
        $region20: #{bert_sentiment_forward.1} parent=11 // pred_fallthru
          _
        // Predicated region
        $region21: #{bert_sentiment_forward.1} parent=11 // pred_check
          %p594 = pneg %p468
        $region22: #{bert_sentiment_forward.1} parent=11 // pred_check_branch
          %596 = sbr.rel (%p594) target = $region24
        $region23: #{bert_sentiment_forward.1} parent=11 // pred_region
          _
        $region24: #{bert_sentiment_forward.1} parent=11 // pred_fallthru
          _
        // Predicated region
        $region25: #{bert_sentiment_forward.1} parent=11 // pred_check
          %p597 = pneg %p489
        $region26: #{bert_sentiment_forward.1} parent=11 // pred_check_branch
          %599 = sbr.rel (%p597) target = $region28
        $region27: #{bert_sentiment_forward.1} parent=11 // pred_region
          _
        $region28: #{bert_sentiment_forward.1} parent=11 // pred_fallthru
          _
        // Predicated region
        $region29: #{bert_sentiment_forward.1} parent=11 // pred_check
          %p600 = pneg %p510
        $region30: #{bert_sentiment_forward.1} parent=11 // pred_check_branch
          %602 = sbr.rel (%p600) target = $region32
        $region31: #{bert_sentiment_forward.1} parent=11 // pred_region
          %s604 = ssub.s32 1024, 1024
          %605 = vsyncadd [#allocation6], %s604
          %s606 = sshll.u32 [#allocation17], 4
          %s607 = int_to_ptr.vmem [resolvable:$true] %s606
          %612 = dma.hbm_to_vmem [thread:$0]  %s18, 1024, %s607, [#allocation6], 64, 64, 4
        $region32: #{bert_sentiment_forward.1} parent=11 // pred_fallthru
          _
        // Predicated region
        $region33: #{bert_sentiment_forward.1} parent=11 // pred_check
          %p613 = pneg %p531
        $region34: #{bert_sentiment_forward.1} parent=11 // pred_check_branch
          %615 = sbr.rel (%p613) target = $region36
        $region35: #{bert_sentiment_forward.1} parent=11 // pred_region
          %s617 = ssub.s32 16, 16
          %618 = vsyncadd [#allocation19], %s617
          %s620 = sshll.u32 [#allocation18], 4
          %s621 = int_to_ptr.vmem [resolvable:$true] %s620
          %623 = dma.hbm_to_vmem [thread:$0]  %s19, 16, %s621, [#allocation19]
        $region36: #{bert_sentiment_forward.1} parent=11 // pred_fallthru
          _
      $region12: #{bert_sentiment_forward.1} parent=5 // pred_fallthru
        _
      %p624 = scmp.lt.s32.totalorder %s29, 4
      // Predicated region
      $region37: #{bert_sentiment_forward.1} parent=5 // pred_check
        %p625 = pneg %p624
      $region38: #{bert_sentiment_forward.1} parent=5 // pred_check_branch
        %627 = sbr.rel (%p625) target = $region40
      $region39: #{bert_sentiment_forward.1} parent=5 // pred_region
        // Predicated region
        $region41: #{bert_sentiment_forward.1} parent=39 // pred_check
          %p628 = pneg %p61
        $region42: #{bert_sentiment_forward.1} parent=39 // pred_check_branch
          %630 = sbr.rel (%p628) target = $region44
        $region43: #{bert_sentiment_forward.1} parent=39 // pred_region
          %p631 = scmp.lt.s32.totalorder %s36, 1
          %s632 = scalar_select %p631, %s36, 1
          %s633 = smul.addr %s632, 8
          %s634 = scalar_lea.vmem %s0, %s633
        $region44: #{bert_sentiment_forward.1} parent=39 // pred_fallthru
          _
        // Predicated region
        $region45: #{bert_sentiment_forward.1} parent=39 // pred_check
          %p635 = pneg %p87
        $region46: #{bert_sentiment_forward.1} parent=39 // pred_check_branch
          %637 = sbr.rel (%p635) target = $region48
        $region47: #{bert_sentiment_forward.1} parent=39 // pred_region
          %p638 = scmp.lt.s32.totalorder %s36, 1
          %s639 = scalar_select %p638, %s36, 1
          %s640 = smul.addr %s639, 2
          %s641 = smul.addr %s640, 8
          %s642 = scalar_lea.vmem %s1, %s641
        $region48: #{bert_sentiment_forward.1} parent=39 // pred_fallthru
          _
        // Predicated region
        $region49: #{bert_sentiment_forward.1} parent=39 // pred_check
          %p643 = pneg %p155
        $region50: #{bert_sentiment_forward.1} parent=39 // pred_check_branch
          %645 = sbr.rel (%p643) target = $region52
        $region51: #{bert_sentiment_forward.1} parent=39 // pred_region
          %p646 = scmp.lt.s32.totalorder %s37, 1
          %s647 = scalar_select %p646, %s37, 1
          %s648 = smul.addr %s647, 48
          %s649 = smul.addr %s648, 4
          %s650 = scalar_lea.vmem %s4, %s649
        $region52: #{bert_sentiment_forward.1} parent=39 // pred_fallthru
          _
        // Predicated region
        $region53: #{bert_sentiment_forward.1} parent=39 // pred_check
          %p651 = pneg %p181
        $region54: #{bert_sentiment_forward.1} parent=39 // pred_check_branch
          %653 = sbr.rel (%p651) target = $region56
        $region55: #{bert_sentiment_forward.1} parent=39 // pred_region
          %p654 = scmp.lt.s32.totalorder %s37, 1
          %s655 = scalar_select %p654, %s37, 1
          %s656 = smul.addr %s655, 3
          %s657 = scalar_lea.vmem %s5, %s656
        $region56: #{bert_sentiment_forward.1} parent=39 // pred_fallthru
          _
        // Predicated region
        $region57: #{bert_sentiment_forward.1} parent=39 // pred_check
          %p658 = pneg %p207
        $region58: #{bert_sentiment_forward.1} parent=39 // pred_check_branch
          %660 = sbr.rel (%p658) target = $region60
        $region59: #{bert_sentiment_forward.1} parent=39 // pred_region
          %s661 = sand.u32 %s29, 1
          %s662 = scalar_lea.sflag [#allocation4], %s661
          %s663 = sand.u32 %s197, 1
          %s664 = smul.addr %s663, 64
          %s665 = scalar_lea.vmem [#allocation7], %s664
          %s667 = ssub.s32 1024, 1024
          %668 = vsyncadd %s662, %s667
          %s669 = smul.addr %s37, 16
          %s670 = smul.addr %s669, 64
          %s671 = scalar_lea.hbm %s6, %s670
          %s672 = sshll.u32 %s665, 4
          %s673 = int_to_ptr.vmem [resolvable:$true] %s672
          %678 = dma.hbm_to_vmem [thread:$0]  %s671, 1024, %s673, %s662, 64, 64, 4
        $region60: #{bert_sentiment_forward.1} parent=39 // pred_fallthru
          _
        // Predicated region
        $region61: #{bert_sentiment_forward.1} parent=39 // pred_check
          %p679 = pneg %p233
        $region62: #{bert_sentiment_forward.1} parent=39 // pred_check_branch
          %681 = sbr.rel (%p679) target = $region64
        $region63: #{bert_sentiment_forward.1} parent=39 // pred_region
          %s682 = sand.u32 %s29, 1
          %s683 = scalar_lea.sflag [#allocation4], %s682
          %s684 = sand.u32 %s223, 1
          %s685 = scalar_lea.vmem [#allocation8], %s684
          %s687 = ssub.s32 16, 16
          %688 = vsyncadd %s683, %s687
          %s689 = smul.addr %s37, 16
          %s690 = scalar_lea.hbm %s7, %s689
          %s692 = sshll.u32 %s685, 4
          %s693 = int_to_ptr.vmem [resolvable:$true] %s692
          %695 = dma.hbm_to_vmem [thread:$0]  %s690, 16, %s693, %s683
        $region64: #{bert_sentiment_forward.1} parent=39 // pred_fallthru
          _
        // Predicated region
        $region65: #{bert_sentiment_forward.1} parent=39 // pred_check
          %p696 = pneg %p259
        $region66: #{bert_sentiment_forward.1} parent=39 // pred_check_branch
          %698 = sbr.rel (%p696) target = $region68
        $region67: #{bert_sentiment_forward.1} parent=39 // pred_region
          %s699 = sand.u32 %s29, 1
          %s700 = scalar_lea.sflag [#allocation4], %s699
          %s701 = sand.u32 %s249, 1
          %s702 = scalar_lea.vmem [#allocation9], %s701
          %s704 = ssub.s32 16, 16
          %705 = vsyncadd %s700, %s704
          %s706 = smul.addr %s37, 16
          %s707 = scalar_lea.hbm %s8, %s706
          %s709 = sshll.u32 %s702, 4
          %s710 = int_to_ptr.vmem [resolvable:$true] %s709
          %712 = dma.hbm_to_vmem [thread:$0]  %s707, 16, %s710, %s700
        $region68: #{bert_sentiment_forward.1} parent=39 // pred_fallthru
          _
        // Predicated region
        $region69: #{bert_sentiment_forward.1} parent=39 // pred_check
          %p713 = pneg %p285
        $region70: #{bert_sentiment_forward.1} parent=39 // pred_check_branch
          %715 = sbr.rel (%p713) target = $region72
        $region71: #{bert_sentiment_forward.1} parent=39 // pred_region
          %s716 = sand.u32 %s29, 1
          %s717 = scalar_lea.sflag [#allocation4], %s716
          %s718 = sand.u32 %s275, 1
          %s719 = scalar_lea.vmem [#allocation10], %s718
          %s721 = ssub.s32 16, 16
          %722 = vsyncadd %s717, %s721
          %s723 = smul.addr %s37, 16
          %s724 = scalar_lea.hbm %s9, %s723
          %s726 = sshll.u32 %s719, 4
          %s727 = int_to_ptr.vmem [resolvable:$true] %s726
          %729 = dma.hbm_to_vmem [thread:$0]  %s724, 16, %s727, %s717
        $region72: #{bert_sentiment_forward.1} parent=39 // pred_fallthru
          _
        // Predicated region
        $region73: #{bert_sentiment_forward.1} parent=39 // pred_check
          %p730 = pneg %p311
        $region74: #{bert_sentiment_forward.1} parent=39 // pred_check_branch
          %732 = sbr.rel (%p730) target = $region76
        $region75: #{bert_sentiment_forward.1} parent=39 // pred_region
          %s733 = sand.u32 %s29, 1
          %s734 = scalar_lea.sflag [#allocation4], %s733
          %s735 = sand.u32 %s301, 1
          %s736 = smul.addr %s735, 128
          %s737 = scalar_lea.vmem [#allocation11], %s736
          %s739 = ssub.s32 2048, 2048
          %740 = vsyncadd %s734, %s739
          %s741 = smul.addr %s37, 32
          %s742 = smul.addr %s741, 64
          %s743 = scalar_lea.hbm %s10, %s742
          %s744 = sshll.u32 %s737, 4
          %s745 = int_to_ptr.vmem [resolvable:$true] %s744
          %750 = dma.hbm_to_vmem [thread:$0]  %s743, 2048, %s745, %s734, 128, 128, 8
        $region76: #{bert_sentiment_forward.1} parent=39 // pred_fallthru
          _
        // Predicated region
        $region77: #{bert_sentiment_forward.1} parent=39 // pred_check
          %p751 = pneg %p337
        $region78: #{bert_sentiment_forward.1} parent=39 // pred_check_branch
          %753 = sbr.rel (%p751) target = $region80
        $region79: #{bert_sentiment_forward.1} parent=39 // pred_region
          %s754 = sand.u32 %s29, 1
          %s755 = scalar_lea.sflag [#allocation4], %s754
          %s756 = sand.u32 %s327, 1
          %s757 = smul.addr %s756, 2
          %s758 = scalar_lea.vmem [#allocation12], %s757
          %s760 = ssub.s32 32, 32
          %761 = vsyncadd %s755, %s760
          %s762 = smul.addr %s37, 2
          %s763 = smul.addr %s762, 16
          %s764 = scalar_lea.hbm %s11, %s763
          %s766 = sshll.u32 %s758, 4
          %s767 = int_to_ptr.vmem [resolvable:$true] %s766
          %769 = dma.hbm_to_vmem [thread:$0]  %s764, 32, %s767, %s755
        $region80: #{bert_sentiment_forward.1} parent=39 // pred_fallthru
          _
        // Predicated region
        $region81: #{bert_sentiment_forward.1} parent=39 // pred_check
          %p770 = pneg %p363
        $region82: #{bert_sentiment_forward.1} parent=39 // pred_check_branch
          %772 = sbr.rel (%p770) target = $region84
        $region83: #{bert_sentiment_forward.1} parent=39 // pred_region
          %s773 = sand.u32 %s29, 1
          %s774 = scalar_lea.sflag [#allocation4], %s773
          %s775 = sand.u32 %s353, 1
          %s776 = smul.addr %s775, 128
          %s777 = scalar_lea.vmem [#allocation13], %s776
          %s779 = ssub.s32 2048, 2048
          %780 = vsyncadd %s774, %s779
          %s781 = smul.addr %s37, 32
          %s782 = smul.addr %s781, 64
          %s783 = scalar_lea.hbm %s12, %s782
          %s784 = sshll.u32 %s777, 4
          %s785 = int_to_ptr.vmem [resolvable:$true] %s784
          %790 = dma.hbm_to_vmem [thread:$0]  %s783, 2048, %s785, %s774, 64, 64, 4
        $region84: #{bert_sentiment_forward.1} parent=39 // pred_fallthru
          _
        // Predicated region
        $region85: #{bert_sentiment_forward.1} parent=39 // pred_check
          %p791 = pneg %p389
        $region86: #{bert_sentiment_forward.1} parent=39 // pred_check_branch
          %793 = sbr.rel (%p791) target = $region88
        $region87: #{bert_sentiment_forward.1} parent=39 // pred_region
          %s794 = sand.u32 %s29, 1
          %s795 = scalar_lea.sflag [#allocation4], %s794
          %s796 = sand.u32 %s379, 1
          %s797 = scalar_lea.vmem [#allocation14], %s796
          %s799 = ssub.s32 16, 16
          %800 = vsyncadd %s795, %s799
          %s801 = smul.addr %s37, 16
          %s802 = scalar_lea.hbm %s13, %s801
          %s804 = sshll.u32 %s797, 4
          %s805 = int_to_ptr.vmem [resolvable:$true] %s804
          %807 = dma.hbm_to_vmem [thread:$0]  %s802, 16, %s805, %s795
        $region88: #{bert_sentiment_forward.1} parent=39 // pred_fallthru
          _
        // Predicated region
        $region89: #{bert_sentiment_forward.1} parent=39 // pred_check
          %p808 = pneg %p415
        $region90: #{bert_sentiment_forward.1} parent=39 // pred_check_branch
          %810 = sbr.rel (%p808) target = $region92
        $region91: #{bert_sentiment_forward.1} parent=39 // pred_region
          %s811 = sand.u32 %s29, 1
          %s812 = scalar_lea.sflag [#allocation4], %s811
          %s813 = sand.u32 %s405, 1
          %s814 = scalar_lea.vmem [#allocation15], %s813
          %s816 = ssub.s32 16, 16
          %817 = vsyncadd %s812, %s816
          %s818 = smul.addr %s37, 16
          %s819 = scalar_lea.hbm %s14, %s818
          %s821 = sshll.u32 %s814, 4
          %s822 = int_to_ptr.vmem [resolvable:$true] %s821
          %824 = dma.hbm_to_vmem [thread:$0]  %s819, 16, %s822, %s812
        $region92: #{bert_sentiment_forward.1} parent=39 // pred_fallthru
          _
        // Predicated region
        $region93: #{bert_sentiment_forward.1} parent=39 // pred_check
          %p825 = pneg %p441
        $region94: #{bert_sentiment_forward.1} parent=39 // pred_check_branch
          %827 = sbr.rel (%p825) target = $region96
        $region95: #{bert_sentiment_forward.1} parent=39 // pred_region
          %s828 = sand.u32 %s29, 1
          %s829 = scalar_lea.sflag [#allocation4], %s828
          %s830 = sand.u32 %s431, 1
          %s831 = scalar_lea.vmem [#allocation16], %s830
          %s833 = ssub.s32 16, 16
          %834 = vsyncadd %s829, %s833
          %s835 = smul.addr %s37, 16
          %s836 = scalar_lea.hbm %s15, %s835
          %s838 = sshll.u32 %s831, 4
          %s839 = int_to_ptr.vmem [resolvable:$true] %s838
          %841 = dma.hbm_to_vmem [thread:$0]  %s836, 16, %s839, %s829
        $region96: #{bert_sentiment_forward.1} parent=39 // pred_fallthru
          _
      $region40: #{bert_sentiment_forward.1} parent=5 // pred_fallthru
        _
      %p842 = scmp.le.s32.totalorder 1, %s29
      %p843 = scmp.lt.s32.totalorder %s29, 5
      %p844 = pnand %p842, %p843
      %p845 = pneg %p844
      // Predicated region
      $region97: #{bert_sentiment_forward.1} parent=5 // pred_check
        _
      $region98: #{bert_sentiment_forward.1} parent=5 // pred_check_branch
        %847 = sbr.rel (%p844) target = $region100
      $region99: #{bert_sentiment_forward.1} parent=5 // pred_region
        %s848 = ssub.s32 %s29, 1
        // Predicated region
        $region101: #{bert_sentiment_forward.1} parent=99 // pred_check
          %p849 = pneg %p114
        $region102: #{bert_sentiment_forward.1} parent=99 // pred_check_branch
          %851 = sbr.rel (%p849) target = $region104
        $region103: #{bert_sentiment_forward.1} parent=99 // pred_region
          %852 = dma.done [#allocation4], 16
        $region104: #{bert_sentiment_forward.1} parent=99 // pred_fallthru
          _
        // Predicated region
        $region105: #{bert_sentiment_forward.1} parent=99 // pred_check
          %p853 = pneg %p135
        $region106: #{bert_sentiment_forward.1} parent=99 // pred_check_branch
          %855 = sbr.rel (%p853) target = $region108
        $region107: #{bert_sentiment_forward.1} parent=99 // pred_region
          %856 = dma.done [#allocation6], 16
        $region108: #{bert_sentiment_forward.1} parent=99 // pred_fallthru
          _
        %s857 = sand.u32 %s34, 1
        %s858 = scalar_lea.sflag [#allocation4], %s857
        %s859 = sand.u32 %s200, 1
        %s860 = smul.addr %s859, 64
        %s861 = scalar_lea.vmem [#allocation7], %s860
        // Predicated region
        $region109: #{bert_sentiment_forward.1} parent=99 // pred_check
          %p862 = pneg %p213
        $region110: #{bert_sentiment_forward.1} parent=99 // pred_check_branch
          %864 = sbr.rel (%p862) target = $region112
        $region111: #{bert_sentiment_forward.1} parent=99 // pred_region
          %865 = dma.done %s858, 1024
        $region112: #{bert_sentiment_forward.1} parent=99 // pred_fallthru
          _
        %s866 = sand.u32 %s34, 1
        %s867 = scalar_lea.sflag [#allocation4], %s866
        %s868 = sand.u32 %s226, 1
        %s869 = scalar_lea.vmem [#allocation8], %s868
        // Predicated region
        $region113: #{bert_sentiment_forward.1} parent=99 // pred_check
          %p870 = pneg %p239
        $region114: #{bert_sentiment_forward.1} parent=99 // pred_check_branch
          %872 = sbr.rel (%p870) target = $region116
        $region115: #{bert_sentiment_forward.1} parent=99 // pred_region
          %873 = dma.done %s867, 16
        $region116: #{bert_sentiment_forward.1} parent=99 // pred_fallthru
          _
        %s874 = sand.u32 %s34, 1
        %s875 = scalar_lea.sflag [#allocation4], %s874
        %s876 = sand.u32 %s252, 1
        %s877 = scalar_lea.vmem [#allocation9], %s876
        // Predicated region
        $region117: #{bert_sentiment_forward.1} parent=99 // pred_check
          %p878 = pneg %p265
        $region118: #{bert_sentiment_forward.1} parent=99 // pred_check_branch
          %880 = sbr.rel (%p878) target = $region120
        $region119: #{bert_sentiment_forward.1} parent=99 // pred_region
          %881 = dma.done %s875, 16
        $region120: #{bert_sentiment_forward.1} parent=99 // pred_fallthru
          _
        %s882 = sand.u32 %s34, 1
        %s883 = scalar_lea.sflag [#allocation4], %s882
        %s884 = sand.u32 %s278, 1
        %s885 = scalar_lea.vmem [#allocation10], %s884
        // Predicated region
        $region121: #{bert_sentiment_forward.1} parent=99 // pred_check
          %p886 = pneg %p291
        $region122: #{bert_sentiment_forward.1} parent=99 // pred_check_branch
          %888 = sbr.rel (%p886) target = $region124
        $region123: #{bert_sentiment_forward.1} parent=99 // pred_region
          %889 = dma.done %s883, 16
        $region124: #{bert_sentiment_forward.1} parent=99 // pred_fallthru
          _
        %s890 = sand.u32 %s34, 1
        %s891 = scalar_lea.sflag [#allocation4], %s890
        %s892 = sand.u32 %s304, 1
        %s893 = smul.addr %s892, 128
        %s894 = scalar_lea.vmem [#allocation11], %s893
        // Predicated region
        $region125: #{bert_sentiment_forward.1} parent=99 // pred_check
          %p895 = pneg %p317
        $region126: #{bert_sentiment_forward.1} parent=99 // pred_check_branch
          %897 = sbr.rel (%p895) target = $region128
        $region127: #{bert_sentiment_forward.1} parent=99 // pred_region
          %898 = dma.done %s891, 2048
        $region128: #{bert_sentiment_forward.1} parent=99 // pred_fallthru
          _
        %s899 = sand.u32 %s34, 1
        %s900 = scalar_lea.sflag [#allocation4], %s899
        %s901 = sand.u32 %s330, 1
        %s902 = smul.addr %s901, 2
        %s903 = scalar_lea.vmem [#allocation12], %s902
        // Predicated region
        $region129: #{bert_sentiment_forward.1} parent=99 // pred_check
          %p904 = pneg %p343
        $region130: #{bert_sentiment_forward.1} parent=99 // pred_check_branch
          %906 = sbr.rel (%p904) target = $region132
        $region131: #{bert_sentiment_forward.1} parent=99 // pred_region
          %907 = dma.done %s900, 32
        $region132: #{bert_sentiment_forward.1} parent=99 // pred_fallthru
          _
        %s908 = sand.u32 %s34, 1
        %s909 = scalar_lea.sflag [#allocation4], %s908
        %s910 = sand.u32 %s356, 1
        %s911 = smul.addr %s910, 128
        %s912 = scalar_lea.vmem [#allocation13], %s911
        // Predicated region
        $region133: #{bert_sentiment_forward.1} parent=99 // pred_check
          %p913 = pneg %p369
        $region134: #{bert_sentiment_forward.1} parent=99 // pred_check_branch
          %915 = sbr.rel (%p913) target = $region136
        $region135: #{bert_sentiment_forward.1} parent=99 // pred_region
          %916 = dma.done %s909, 2048
        $region136: #{bert_sentiment_forward.1} parent=99 // pred_fallthru
          _
        %s917 = sand.u32 %s34, 1
        %s918 = scalar_lea.sflag [#allocation4], %s917
        %s919 = sand.u32 %s382, 1
        %s920 = scalar_lea.vmem [#allocation14], %s919
        // Predicated region
        $region137: #{bert_sentiment_forward.1} parent=99 // pred_check
          %p921 = pneg %p395
        $region138: #{bert_sentiment_forward.1} parent=99 // pred_check_branch
          %923 = sbr.rel (%p921) target = $region140
        $region139: #{bert_sentiment_forward.1} parent=99 // pred_region
          %924 = dma.done %s918, 16
        $region140: #{bert_sentiment_forward.1} parent=99 // pred_fallthru
          _
        %s925 = sand.u32 %s34, 1
        %s926 = scalar_lea.sflag [#allocation4], %s925
        %s927 = sand.u32 %s408, 1
        %s928 = scalar_lea.vmem [#allocation15], %s927
        // Predicated region
        $region141: #{bert_sentiment_forward.1} parent=99 // pred_check
          %p929 = pneg %p421
        $region142: #{bert_sentiment_forward.1} parent=99 // pred_check_branch
          %931 = sbr.rel (%p929) target = $region144
        $region143: #{bert_sentiment_forward.1} parent=99 // pred_region
          %932 = dma.done %s926, 16
        $region144: #{bert_sentiment_forward.1} parent=99 // pred_fallthru
          _
        %s933 = sand.u32 %s34, 1
        %s934 = scalar_lea.sflag [#allocation4], %s933
        %s935 = sand.u32 %s434, 1
        %s936 = scalar_lea.vmem [#allocation16], %s935
        // Predicated region
        $region145: #{bert_sentiment_forward.1} parent=99 // pred_check
          %p937 = pneg %p447
        $region146: #{bert_sentiment_forward.1} parent=99 // pred_check_branch
          %939 = sbr.rel (%p937) target = $region148
        $region147: #{bert_sentiment_forward.1} parent=99 // pred_region
          %940 = dma.done %s934, 16
        $region148: #{bert_sentiment_forward.1} parent=99 // pred_fallthru
          _
        // Predicated region
        $region149: #{bert_sentiment_forward.1} parent=99 // pred_check
          %p941 = pneg %p510
        $region150: #{bert_sentiment_forward.1} parent=99 // pred_check_branch
          %943 = sbr.rel (%p941) target = $region152
        $region151: #{bert_sentiment_forward.1} parent=99 // pred_region
          %944 = dma.done [#allocation6], 1024
        $region152: #{bert_sentiment_forward.1} parent=99 // pred_fallthru
          _
        // Predicated region
        $region153: #{bert_sentiment_forward.1} parent=99 // pred_check
          %p945 = pneg %p531
        $region154: #{bert_sentiment_forward.1} parent=99 // pred_check_branch
          %947 = sbr.rel (%p945) target = $region156
        $region155: #{bert_sentiment_forward.1} parent=99 // pred_region
          %948 = dma.done [#allocation19], 16
        $region156: #{bert_sentiment_forward.1} parent=99 // pred_fallthru
          _
        %p949 = scmp.lt.s32.totalorder %s38, 1
        %s950 = scalar_select %p949, %s38, 1
        %s951 = smul.addr %s950, 8
        %s952 = scalar_lea.vmem %s0, %s951
        %p953 = pneg %p67
        %p954 = pneg %p64
        %p955 = scmp.lt.s32.totalorder %s38, 1
        %s956 = scalar_select %p955, %s38, 1
        %s957 = smul.addr %s956, 2
        %s958 = smul.addr %s957, 8
        %s959 = scalar_lea.vmem %s1, %s958
        %p960 = pneg %p93
        %p961 = pneg %p90
        %p962 = pneg %p114
        %p963 = pneg %p111
        %p964 = pneg %p135
        %p965 = pneg %p132
        %p966 = scmp.lt.s32.totalorder %s39, 1
        %s967 = scalar_select %p966, %s39, 1
        %s968 = smul.addr %s967, 48
        %s969 = smul.addr %s968, 4
        %s970 = scalar_lea.vmem %s4, %s969
        %p971 = pneg %p161
        %p972 = pneg %p158
        %p973 = scmp.lt.s32.totalorder %s39, 1
        %s974 = scalar_select %p973, %s39, 1
        %s975 = smul.addr %s974, 3
        %s976 = scalar_lea.vmem %s5, %s975
        %p977 = pneg %p187
        %p978 = pneg %p184
        %s979 = sand.u32 %s34, 1
        %s980 = scalar_lea.sflag [#allocation4], %s979
        %s981 = sand.u32 %s200, 1
        %s982 = smul.addr %s981, 64
        %s983 = scalar_lea.vmem [#allocation7], %s982
        %p984 = pneg %p213
        %p985 = pneg %p210
        %s986 = sand.u32 %s34, 1
        %s987 = scalar_lea.sflag [#allocation4], %s986
        %s988 = sand.u32 %s226, 1
        %s989 = scalar_lea.vmem [#allocation8], %s988
        %p990 = pneg %p239
        %p991 = pneg %p236
        %s992 = sand.u32 %s34, 1
        %s993 = scalar_lea.sflag [#allocation4], %s992
        %s994 = sand.u32 %s252, 1
        %s995 = scalar_lea.vmem [#allocation9], %s994
        %p996 = pneg %p265
        %p997 = pneg %p262
        %s998 = sand.u32 %s34, 1
        %s999 = scalar_lea.sflag [#allocation4], %s998
        %s1000 = sand.u32 %s278, 1
        %s1001 = scalar_lea.vmem [#allocation10], %s1000
        %p1002 = pneg %p291
        %p1003 = pneg %p288
        %s1004 = sand.u32 %s34, 1
        %s1005 = scalar_lea.sflag [#allocation4], %s1004
        %s1006 = sand.u32 %s304, 1
        %s1007 = smul.addr %s1006, 128
        %s1008 = scalar_lea.vmem [#allocation11], %s1007
        %p1009 = pneg %p317
        %p1010 = pneg %p314
        %s1011 = sand.u32 %s34, 1
        %s1012 = scalar_lea.sflag [#allocation4], %s1011
        %s1013 = sand.u32 %s330, 1
        %s1014 = smul.addr %s1013, 2
        %s1015 = scalar_lea.vmem [#allocation12], %s1014
        %p1016 = pneg %p343
        %p1017 = pneg %p340
        %s1018 = sand.u32 %s34, 1
        %s1019 = scalar_lea.sflag [#allocation4], %s1018
        %s1020 = sand.u32 %s356, 1
        %s1021 = smul.addr %s1020, 128
        %s1022 = scalar_lea.vmem [#allocation13], %s1021
        %p1023 = pneg %p369
        %p1024 = pneg %p366
        %s1025 = sand.u32 %s34, 1
        %s1026 = scalar_lea.sflag [#allocation4], %s1025
        %s1027 = sand.u32 %s382, 1
        %s1028 = scalar_lea.vmem [#allocation14], %s1027
        %p1029 = pneg %p395
        %p1030 = pneg %p392
        %s1031 = sand.u32 %s34, 1
        %s1032 = scalar_lea.sflag [#allocation4], %s1031
        %s1033 = sand.u32 %s408, 1
        %s1034 = scalar_lea.vmem [#allocation15], %s1033
        %p1035 = pneg %p421
        %p1036 = pneg %p418
        %s1037 = sand.u32 %s34, 1
        %s1038 = scalar_lea.sflag [#allocation4], %s1037
        %s1039 = sand.u32 %s434, 1
        %s1040 = scalar_lea.vmem [#allocation16], %s1039
        %p1041 = pneg %p447
        %p1042 = pneg %p444
        %p1043 = pneg %p468
        %p1044 = pneg %p465
        %p1045 = pneg %p489
        %p1046 = pneg %p486
        %p1047 = pneg %p510
        %p1048 = pneg %p507
        %p1049 = pneg %p531
        %p1050 = pneg %p528
        %p1051 = pneg %p557
        %p1052 = pneg %p554
        %p1053 = scmp.lt.s32.totalorder %s38, 1
        %s1054 = scalar_select %p1053, %s38, 1
        %s1055 = smul.addr %s1054, 8
        %s1056 = scalar_lea.vmem %s20, %s1055
        %p1057 = scmp.lt.s32.totalorder %s38, 1
        %s1058 = scalar_select %p1057, %s38, 1
        %s1059 = smul.addr %s1058, 8
        %s1060 = scalar_lea.vmem %s0, %s1059
        %p1061 = scmp.lt.s32.totalorder %s38, 1
        %s1062 = scalar_select %p1061, %s38, 1
        %s1063 = smul.addr %s1062, 2
        %s1064 = smul.addr %s1063, 8
        %s1065 = scalar_lea.vmem %s1, %s1064
        %p1066 = scmp.lt.s32.totalorder %s39, 1
        %s1067 = scalar_select %p1066, %s39, 1
        %s1068 = smul.addr %s1067, 48
        %s1069 = smul.addr %s1068, 4
        %s1070 = scalar_lea.vmem %s4, %s1069
        %p1071 = scmp.lt.s32.totalorder %s39, 1
        %s1072 = scalar_select %p1071, %s39, 1
        %s1073 = smul.addr %s1072, 3
        %s1074 = scalar_lea.vmem %s5, %s1073
        %p1075 = scmp.lt.s32.totalorder %s38, 1
        %s1076 = scalar_select %p1075, %s38, 1
        %s1077 = smul.addr %s1076, 8
        %s1078 = scalar_lea.vmem %s20, %s1077
        %p1080 = scmp.eq.s32.totalorder %s39, 0
        // Predicated region
        $region157: #{bert_sentiment_forward.1} parent=99 // pred_check
          %p1081 = pneg %p1080
        $region158: #{bert_sentiment_forward.1} parent=99 // pred_check_branch
          %1083 = sbr.rel (%p1081) target = $region160
        $region159: #{bert_sentiment_forward.1} parent=99 // pred_region
          %v1084 = vld [vmem:[%s1060] sm:$0xff]
          %v1085 = vld [vmem:[#allocation3] sm:$0x1]
          %v1086 = vld [vmem:[#allocation5] sm:$0x1]
          %1087 = vadd.xlane.f32.xlu0 %v1084
          %v1088 = vpop.xlane.xlu0 %1087
          %v1089 = vrcp.pop 128.0
          %v1090 = vmul.f32 %v1088, %v1089
          %v1091 = vsub.f32 %v1084, %v1090
          %v1092 = vmul.f32 %v1091, %v1091
          %1093 = vadd.xlane.f32.xlu0 %v1092
          %v1094 = vpop.xlane.xlu0 %1093
          %v1095 = vmul.f32 %v1094, %v1089
          %v1096 = vadd.f32 %v1095, 1e-12
          %v1097 = vrsqrt.pop %v1096
          %v1098 = vmul.f32 %v1091, %v1097
          %v1100 = vlaneseq
          %v1101 = vshrl.u32 %v1100, 7
          %v1102 = vsub.s32 0, %v1101
          %v1103 = vrot.slane %v1085, %v1102
          %v1105 = vmul.f32 %v1098, %v1103
          %v1107 = vlaneseq
          %v1108 = vshrl.u32 %v1107, 7
          %v1109 = vsub.s32 0, %v1108
          %v1110 = vrot.slane %v1086, %v1109
          %v1112 = vadd.f32 %v1105, %v1110
          %1113 = vst [vmem:[#allocation2] sm:$0xff] %v1112
        $region160: #{bert_sentiment_forward.1} parent=99 // pred_fallthru
          _
        %v1114 = vld [vmem:[#allocation2] sm:$0xff]
        %v1115 = vpack.c.bf16 %v1114, %v1114
        %v1116 = vld [vmem:[%s1070] sm:$0xff]
        %v1117 = vld [vmem:[%s1070 + $0x8] sm:$0xf]
        %v1118 = vld [vmem:[%s1070 + $0xc] sm:$0xff]
        %v1119 = vld [vmem:[%s1070 + $0x14] sm:$0xf]
        %v1120 = vld [vmem:[%s1070 + $0x18] sm:$0xff]
        %v1121 = vld [vmem:[%s1070 + $0x20] sm:$0xf]
        %v1122 = vld [vmem:[%s1070 + $0x24] sm:$0xff]
        %v1123 = vld [vmem:[%s1070 + $0x2c] sm:$0xf]
        %v1124 = vld [vmem:[%s1070 + $0x30] sm:$0xff]
        %v1125 = vld [vmem:[%s1070 + $0x38] sm:$0xf]
        %v1126 = vld [vmem:[%s1070 + $0x3c] sm:$0xff]
        %v1127 = vld [vmem:[%s1070 + $0x44] sm:$0xf]
        %v1128 = vld [vmem:[%s1070 + $0x48] sm:$0xff]
        %v1129 = vld [vmem:[%s1070 + $0x50] sm:$0xf]
        %v1130 = vld [vmem:[%s1070 + $0x54] sm:$0xff]
        %v1131 = vld [vmem:[%s1070 + $0x5c] sm:$0xf]
        %v1132 = vld [vmem:[%s1070 + $0x60] sm:$0xff]
        %v1133 = vld [vmem:[%s1070 + $0x68] sm:$0xf]
        %v1134 = vld [vmem:[%s1070 + $0x6c] sm:$0xff]
        %v1135 = vld [vmem:[%s1070 + $0x74] sm:$0xf]
        %v1136 = vld [vmem:[%s1070 + $0x78] sm:$0xff]
        %v1137 = vld [vmem:[%s1070 + $0x80] sm:$0xf]
        %v1138 = vld [vmem:[%s1070 + $0x84] sm:$0xff]
        %v1139 = vld [vmem:[%s1070 + $0x8c] sm:$0xf]
        %v1140 = vld [vmem:[%s1070 + $0x90] sm:$0xff]
        %v1141 = vld [vmem:[%s1070 + $0x98] sm:$0xf]
        %v1142 = vld [vmem:[%s1070 + $0x9c] sm:$0xff]
        %v1143 = vld [vmem:[%s1070 + $0xa4] sm:$0xf]
        %v1144 = vld [vmem:[%s1070 + $0xa8] sm:$0xff]
        %v1145 = vld [vmem:[%s1070 + $0xb0] sm:$0xf]
        %v1146 = vld [vmem:[%s1070 + $0xb4] sm:$0xff]
        %v1147 = vld [vmem:[%s1070 + $0xbc] sm:$0xf]
        %v1148 = vld [vmem:[%s1074] sm:$0x7]
        %v1150 = vlaneseq
        %v1151 = vshrl.u32 %v1150, 7
        %v1152 = vsub.s32 0, %v1151
        %v1153 = vrot.slane %v1148, %v1152
        %v1154 = vlaneseq
        %v1155 = vshrl.u32 %v1154, 7
        %v1156 = vsub.s32 1, %v1155
        %v1157 = vrot.slane %v1148, %v1156
        %v1158 = vlaneseq
        %v1159 = vshrl.u32 %v1158, 7
        %v1160 = vsub.s32 2, %v1159
        %v1161 = vrot.slane %v1148, %v1160
        %v1197 = vunpack.c.l.b16 %v1116
        %v1198 = vunpack.c.h.b16 %v1116
        %v1199 = vunpack.c.l.b16 %v1117
        %v1200 = vunpack.c.l.b16 %v1118
        %v1201 = vunpack.c.h.b16 %v1118
        %v1202 = vunpack.c.l.b16 %v1119
        %v1203 = vunpack.c.l.b16 %v1120
        %v1204 = vunpack.c.h.b16 %v1120
        %v1205 = vunpack.c.l.b16 %v1121
        %v1206 = vunpack.c.l.b16 %v1122
        %v1207 = vunpack.c.h.b16 %v1122
        %v1208 = vunpack.c.l.b16 %v1123
        %v1209 = vunpack.c.l.b16 %v1124
        %v1210 = vunpack.c.h.b16 %v1124
        %v1211 = vunpack.c.l.b16 %v1125
        %v1212 = vunpack.c.l.b16 %v1126
        %v1213 = vunpack.c.h.b16 %v1126
        %v1214 = vunpack.c.l.b16 %v1127
        %v1215 = vunpack.c.l.b16 %v1128
        %v1216 = vunpack.c.h.b16 %v1128
        %v1217 = vunpack.c.l.b16 %v1129
        %v1218 = vunpack.c.l.b16 %v1130
        %v1219 = vunpack.c.h.b16 %v1130
        %v1220 = vunpack.c.l.b16 %v1131
        %v1221 = vunpack.c.l.b16 %v1132
        %v1222 = vunpack.c.h.b16 %v1132
        %v1223 = vunpack.c.l.b16 %v1133
        %v1224 = vunpack.c.l.b16 %v1134
        %v1225 = vunpack.c.h.b16 %v1134
        %v1226 = vunpack.c.l.b16 %v1135
        %v1227 = vunpack.c.l.b16 %v1136
        %v1228 = vunpack.c.h.b16 %v1136
        %v1229 = vunpack.c.l.b16 %v1137
        %v1230 = vunpack.c.l.b16 %v1138
        %v1231 = vunpack.c.h.b16 %v1138
        %v1232 = vunpack.c.l.b16 %v1139
        %v1233 = vunpack.c.l.b16 %v1140
        %v1234 = vunpack.c.h.b16 %v1140
        %v1235 = vunpack.c.l.b16 %v1141
        %v1236 = vunpack.c.l.b16 %v1142
        %v1237 = vunpack.c.h.b16 %v1142
        %v1238 = vunpack.c.l.b16 %v1143
        %v1239 = vunpack.c.l.b16 %v1144
        %v1240 = vunpack.c.h.b16 %v1144
        %v1241 = vunpack.c.l.b16 %v1145
        %v1242 = vunpack.c.l.b16 %v1146
        %v1243 = vunpack.c.h.b16 %v1146
        %v1244 = vunpack.c.l.b16 %v1147
        %v1245 = vpack.c.b16 %v1200, %v1197
        %v1246 = vpack.c.b16 %v1201, %v1198
        %v1247 = vpack.c.b16 %v1202, %v1199
        %v1248 = vpack.c.b16 %v1206, %v1203
        %v1249 = vpack.c.b16 %v1207, %v1204
        %v1250 = vpack.c.b16 %v1208, %v1205
        %v1251 = vpack.c.b16 %v1212, %v1209
        %v1252 = vpack.c.b16 %v1213, %v1210
        %v1253 = vpack.c.b16 %v1214, %v1211
        %v1254 = vpack.c.b16 %v1218, %v1215
        %v1255 = vpack.c.b16 %v1219, %v1216
        %v1256 = vpack.c.b16 %v1220, %v1217
        %v1257 = vpack.c.b16 %v1224, %v1221
        %v1258 = vpack.c.b16 %v1225, %v1222
        %v1259 = vpack.c.b16 %v1226, %v1223
        %v1260 = vpack.c.b16 %v1230, %v1227
        %v1261 = vpack.c.b16 %v1231, %v1228
        %v1262 = vpack.c.b16 %v1232, %v1229
        %v1263 = vpack.c.b16 %v1236, %v1233
        %v1264 = vpack.c.b16 %v1237, %v1234
        %v1265 = vpack.c.b16 %v1238, %v1235
        %v1266 = vpack.c.b16 %v1242, %v1239
        %v1267 = vpack.c.b16 %v1243, %v1240
        %v1268 = vpack.c.b16 %v1244, %v1241
        %1293 = vmatprep.subr.bf16.mxu0 %v1267
        %1294 = vmatpush1.bf16.msra.mxu0 %v1266
        %1295 = vmatprep.subr.bf16.mxu0 %v1264
        %1296 = vmatpush1.bf16.msra.mxu0 %v1263
        %1297 = vmatprep.subr.bf16.mxu0 %v1261
        %1298 = vmatpush1.bf16.msra.mxu0 %v1260
        %1299 = vmatprep.subr.bf16.mxu0 %v1258
        %1300 = vmatpush1.bf16.msra.mxu0 %v1257
        %1301 = vmatprep.subr.bf16.mxu0 %v1255
        %1302 = vmatpush1.bf16.msra.mxu0 %v1254
        %1303 = vmatprep.subr.bf16.mxu0 %v1252
        %1304 = vmatpush1.bf16.msra.mxu0 %v1251
        %1305 = vmatprep.subr.bf16.mxu0 %v1249
        %1306 = vmatpush1.bf16.msra.mxu0 %v1248
        %1307 = vmatprep.subr.bf16.mxu0 %v1246
        %1308 = vmatpush1.bf16.msra.mxu0 %v1245
        %1309 = vmatprep.subr.bf16.mxu0 0
        %1310 = vmatpush2.bf16.msra.mxu0 0
        %1311 = vmatprep.subr.bf16.mxu0 0
        %1312 = vmatpush2.bf16.msra.mxu0 0
        %1313 = vmatprep.subr.bf16.mxu0 0
        %1314 = vmatpush2.bf16.msra.mxu0 0
        %1315 = vmatprep.subr.bf16.mxu0 0
        %1316 = vmatpush2.bf16.msra.mxu0 0
        %1317 = vmatprep.subr.bf16.mxu0 0
        %1318 = vmatpush2.bf16.msra.mxu0 0
        %1319 = vmatprep.subr.bf16.mxu0 0
        %1320 = vmatpush2.bf16.msra.mxu0 0
        %1321 = vmatprep.subr.bf16.mxu0 0
        %1322 = vmatpush2.bf16.msra.mxu0 0
        %1323 = vmatprep.subr.bf16.mxu0 0
        %1324 = vmatpush2.bf16.msra.mxu0 0
        %1325 = vmatprep.mubr.bf16.mxu0 0
        %1326 = vmatmul.mubr.bf16.gmra.mxu0 %v1115
        %v1327 = vpop.f32.mrf.mxu0
        %v1328 = vadd.f32 %v1153, %v1327
        %v1329 = vpop.f32.mrf.mxu0
        %v1330 = vadd.f32 %v1157, %v1329
        %v1331 = vpop.f32.mrf.mxu0
        %v1332 = vpop.f32.mrf.mxu0
        %1333 = vdwg.mxu0
        %1334 = vmatprep.subr.bf16.mxu0 0
        %1335 = vmatpush1.bf16.msra.mxu0 %v1268
        %1336 = vmatprep.subr.bf16.mxu0 0
        %1337 = vmatpush1.bf16.msra.mxu0 %v1265
        %1338 = vmatprep.subr.bf16.mxu0 0
        %1339 = vmatpush1.bf16.msra.mxu0 %v1262
        %1340 = vmatprep.subr.bf16.mxu0 0
        %1341 = vmatpush1.bf16.msra.mxu0 %v1259
        %1342 = vmatprep.subr.bf16.mxu0 0
        %1343 = vmatpush1.bf16.msra.mxu0 %v1256
        %1344 = vmatprep.subr.bf16.mxu0 0
        %1345 = vmatpush1.bf16.msra.mxu0 %v1253
        %1346 = vmatprep.subr.bf16.mxu0 0
        %1347 = vmatpush1.bf16.msra.mxu0 %v1250
        %1348 = vmatprep.subr.bf16.mxu0 0
        %1349 = vmatpush1.bf16.msra.mxu0 %v1247
        %1350 = vmatprep.subr.bf16.mxu0 0
        %1351 = vmatpush2.bf16.msra.mxu0 0
        %1352 = vmatprep.subr.bf16.mxu0 0
        %1353 = vmatpush2.bf16.msra.mxu0 0
        %1354 = vmatprep.subr.bf16.mxu0 0
        %1355 = vmatpush2.bf16.msra.mxu0 0
        %1356 = vmatprep.subr.bf16.mxu0 0
        %1357 = vmatpush2.bf16.msra.mxu0 0
        %1358 = vmatprep.subr.bf16.mxu0 0
        %1359 = vmatpush2.bf16.msra.mxu0 0
        %1360 = vmatprep.subr.bf16.mxu0 0
        %1361 = vmatpush2.bf16.msra.mxu0 0
        %1362 = vmatprep.subr.bf16.mxu0 0
        %1363 = vmatpush2.bf16.msra.mxu0 0
        %1364 = vmatprep.subr.bf16.mxu0 0
        %1365 = vmatpush2.bf16.msra.mxu0 0
        %1366 = vmatprep.mubr.bf16.mxu0 0
        %1367 = vmatmul.mubr.bf16.gmra.mxu0 %v1115
        %v1368 = vpop.f32.mrf.mxu0
        %v1369 = vadd.f32 %v1161, %v1368
        %v1370 = vpop.f32.mrf.mxu0
        %v1371 = vpop.f32.mrf.mxu0
        %v1372 = vpop.f32.mrf.mxu0
        %1373 = vdwg.mxu0
        %v1374 = vpack.c.bf16 %v1328, %v1328
        %v1375 = vpack.c.bf16 %v1330, %v1330
        %v1376 = vpack.c.bf16 %v1369, %v1369
        %vm1377 = vcmask 523264
        %v1379 = vsel %vm1377, %v1374, 0
        %v1382 = vsel %vm1377, %v1375, 0
        %1384 = vmatprep.subr.bf16.mxu0 0
        %1385 = vmatpush1.bf16.xpose.msra.mxu0 0
        %1386 = vmatprep.subr.bf16.mxu0 0
        %1387 = vmatpush1.bf16.xpose.msra.mxu0 0
        %1388 = vmatprep.subr.bf16.mxu0 0
        %1389 = vmatpush1.bf16.xpose.msra.mxu0 0
        %1390 = vmatprep.subr.bf16.mxu0 0
        %1391 = vmatpush1.bf16.xpose.msra.mxu0 0
        %1392 = vmatprep.subr.bf16.mxu0 0
        %1393 = vmatpush1.bf16.xpose.msra.mxu0 0
        %1394 = vmatprep.subr.bf16.mxu0 0
        %1395 = vmatpush1.bf16.xpose.msra.mxu0 0
        %1396 = vmatprep.subr.bf16.mxu0 0
        %1397 = vmatpush1.bf16.xpose.msra.mxu0 0
        %1398 = vmatprep.subr.bf16.mxu0 0
        %1399 = vmatpush1.bf16.xpose.msra.mxu0 %v1382
        %1400 = vmatprep.subr.bf16.mxu0 0
        %1401 = vmatpush2.bf16.xpose.msra.mxu0 0
        %1402 = vmatprep.subr.bf16.mxu0 0
        %1403 = vmatpush2.bf16.xpose.msra.mxu0 0
        %1404 = vmatprep.subr.bf16.mxu0 0
        %1405 = vmatpush2.bf16.xpose.msra.mxu0 0
        %1406 = vmatprep.subr.bf16.mxu0 0
        %1407 = vmatpush2.bf16.xpose.msra.mxu0 0
        %1408 = vmatprep.subr.bf16.mxu0 0
        %1409 = vmatpush2.bf16.xpose.msra.mxu0 0
        %1410 = vmatprep.subr.bf16.mxu0 0
        %1411 = vmatpush2.bf16.xpose.msra.mxu0 0
        %1412 = vmatprep.subr.bf16.mxu0 0
        %1413 = vmatpush2.bf16.xpose.msra.mxu0 0
        %1414 = vmatprep.subr.bf16.mxu0 0
        %1415 = vmatpush2.bf16.xpose.msra.mxu0 0
        %1416 = vmatprep.mubr.bf16.mxu0 0
        %1417 = vmatmul.mubr.bf16.gmra.mxu0 %v1379
        %v1418 = vpop.f32.mrf.mxu0
        %v1419 = vadd.f32 0.0, %v1418
        %v1420 = vpop.f32.mrf.mxu0
        %v1421 = vpop.f32.mrf.mxu0
        %v1422 = vpop.f32.mrf.mxu0
        %1423 = vdwg.mxu0
        %v1424 = vmul.f32 %v1419, 0.125
        %1426 = vrot.lane.b32.xlu0 %v1374, 64
        %v1427 = vpop.permute.xlu0 %1426
        %1429 = vrot.lane.b32.xlu0 %v1375, 64
        %v1430 = vpop.permute.xlu0 %1429
        %v1432 = vsel %vm1377, %v1427, 0
        %v1435 = vsel %vm1377, %v1430, 0
        %1437 = vmatprep.subr.bf16.mxu0 0
        %1438 = vmatpush1.bf16.xpose.msra.mxu0 0
        %1439 = vmatprep.subr.bf16.mxu0 0
        %1440 = vmatpush1.bf16.xpose.msra.mxu0 0
        %1441 = vmatprep.subr.bf16.mxu0 0
        %1442 = vmatpush1.bf16.xpose.msra.mxu0 0
        %1443 = vmatprep.subr.bf16.mxu0 0
        %1444 = vmatpush1.bf16.xpose.msra.mxu0 0
        %1445 = vmatprep.subr.bf16.mxu0 0
        %1446 = vmatpush1.bf16.xpose.msra.mxu0 0
        %1447 = vmatprep.subr.bf16.mxu0 0
        %1448 = vmatpush1.bf16.xpose.msra.mxu0 0
        %1449 = vmatprep.subr.bf16.mxu0 0
        %1450 = vmatpush1.bf16.xpose.msra.mxu0 0
        %1451 = vmatprep.subr.bf16.mxu0 0
        %1452 = vmatpush1.bf16.xpose.msra.mxu0 %v1435
        %1453 = vmatprep.subr.bf16.mxu0 0
        %1454 = vmatpush2.bf16.xpose.msra.mxu0 0
        %1455 = vmatprep.subr.bf16.mxu0 0
        %1456 = vmatpush2.bf16.xpose.msra.mxu0 0
        %1457 = vmatprep.subr.bf16.mxu0 0
        %1458 = vmatpush2.bf16.xpose.msra.mxu0 0
        %1459 = vmatprep.subr.bf16.mxu0 0
        %1460 = vmatpush2.bf16.xpose.msra.mxu0 0
        %1461 = vmatprep.subr.bf16.mxu0 0
        %1462 = vmatpush2.bf16.xpose.msra.mxu0 0
        %1463 = vmatprep.subr.bf16.mxu0 0
        %1464 = vmatpush2.bf16.xpose.msra.mxu0 0
        %1465 = vmatprep.subr.bf16.mxu0 0
        %1466 = vmatpush2.bf16.xpose.msra.mxu0 0
        %1467 = vmatprep.subr.bf16.mxu0 0
        %1468 = vmatpush2.bf16.xpose.msra.mxu0 0
        %1469 = vmatprep.mubr.bf16.mxu0 0
        %1470 = vmatmul.mubr.bf16.gmra.mxu0 %v1432
        %v1471 = vpop.f32.mrf.mxu0
        %v1472 = vadd.f32 0.0, %v1471
        %v1473 = vpop.f32.mrf.mxu0
        %v1474 = vpop.f32.mrf.mxu0
        %v1475 = vpop.f32.mrf.mxu0
        %1476 = vdwg.mxu0
        %v1477 = vmul.f32 %v1472, 0.125
        %v1478 = vld [vmem:[%s1065] sm:$0xff]
        %v1479 = vld [vmem:[%s1065 + $0x8] sm:$0xff]
        %v1480 = vadd.f32 %v1424, %v1478
        %v1481 = vadd.f32 %v1477, %v1479
        %vm1482 = vcmask 64512
        %v1483 = vsel %vm1482, %v1480, -inf
        %1484 = vmax.xlane.f32.xlu0 %v1483
        %v1485 = vpop.xlane.xlu0 %1484
        %v1486 = vsel %vm1482, %v1481, -inf
        %1487 = vmax.xlane.f32.xlu0 %v1486
        %v1488 = vpop.xlane.xlu0 %1487
        %v1489 = vsub.f32 %v1480, %v1485
        %v1490 = vsub.f32 %v1481, %v1488
        %v1491 = vmul.f32 %v1489, 1.442695
        %v1492 = vpow.pop %v1491
        %v1493 = vmul.f32 %v1490, 1.442695
        %v1494 = vpow.pop %v1493
        %v1495 = vsel %vm1482, %v1492, 0.0
        %1496 = vadd.xlane.f32.xlu0 %v1495
        %v1497 = vpop.xlane.xlu0 %1496
        %v1498 = vsel %vm1482, %v1494, 0.0
        %1499 = vadd.xlane.f32.xlu0 %v1498
        %v1500 = vpop.xlane.xlu0 %1499
        %v1501 = vrcp.pop %v1497
        %v1502 = vrcp.pop %v1500
        %v1503 = vmul.f32 %v1492, %v1501
        %v1504 = vmul.f32 %v1494, %v1502
        %v1505 = vpack.c.bf16 %v1504, %v1503
        %v1507 = vsel %vm1482, %v1505, 0
        %vm1509 = vcmask 1043456
        %v1511 = vsel %vm1509, %v1376, 0
        %1513 = vmatprep.subr.bf16.mxu0 0
        %1514 = vmatpush1.bf16.msra.mxu0 0
        %1515 = vmatprep.subr.bf16.mxu0 0
        %1516 = vmatpush1.bf16.msra.mxu0 0
        %1517 = vmatprep.subr.bf16.mxu0 0
        %1518 = vmatpush1.bf16.msra.mxu0 0
        %1519 = vmatprep.subr.bf16.mxu0 0
        %1520 = vmatpush1.bf16.msra.mxu0 0
        %1521 = vmatprep.subr.bf16.mxu0 0
        %1522 = vmatpush1.bf16.msra.mxu0 0
        %1523 = vmatprep.subr.bf16.mxu0 0
        %1524 = vmatpush1.bf16.msra.mxu0 0
        %1525 = vmatprep.subr.bf16.mxu0 0
        %1526 = vmatpush1.bf16.msra.mxu0 0
        %1527 = vmatprep.subr.bf16.mxu0 0
        %1528 = vmatpush1.bf16.msra.mxu0 %v1511
        %1529 = vmatprep.subr.bf16.mxu0 0
        %1530 = vmatpush2.bf16.msra.mxu0 0
        %1531 = vmatprep.subr.bf16.mxu0 0
        %1532 = vmatpush2.bf16.msra.mxu0 0
        %1533 = vmatprep.subr.bf16.mxu0 0
        %1534 = vmatpush2.bf16.msra.mxu0 0
        %1535 = vmatprep.subr.bf16.mxu0 0
        %1536 = vmatpush2.bf16.msra.mxu0 0
        %1537 = vmatprep.subr.bf16.mxu0 0
        %1538 = vmatpush2.bf16.msra.mxu0 0
        %1539 = vmatprep.subr.bf16.mxu0 0
        %1540 = vmatpush2.bf16.msra.mxu0 0
        %1541 = vmatprep.subr.bf16.mxu0 0
        %1542 = vmatpush2.bf16.msra.mxu0 0
        %1543 = vmatprep.subr.bf16.mxu0 0
        %1544 = vmatpush2.bf16.msra.mxu0 0
        %1545 = vmatprep.mubr.bf16.mxu0 0
        %1546 = vmatmul.mubr.bf16.gmra.mxu0 %v1507
        %v1547 = vpop.f32.mrf.mxu0
        %v1548 = vadd.f32 0.0, %v1547
        %v1549 = vpop.f32.mrf.mxu0
        %v1550 = vpop.f32.mrf.mxu0
        %v1551 = vpop.f32.mrf.mxu0
        %1552 = vdwg.mxu0
        %v1554 = vrot.slane %v1505, 4
        %1556 = vrot.lane.b32.xlu0 %v1376, 64
        %v1557 = vpop.permute.xlu0 %1556
        %v1559 = vsel %vm1482, %v1554, 0
        %v1562 = vsel %vm1509, %v1557, 0
        %1564 = vmatprep.subr.bf16.mxu0 0
        %1565 = vmatpush1.bf16.msra.mxu0 0
        %1566 = vmatprep.subr.bf16.mxu0 0
        %1567 = vmatpush1.bf16.msra.mxu0 0
        %1568 = vmatprep.subr.bf16.mxu0 0
        %1569 = vmatpush1.bf16.msra.mxu0 0
        %1570 = vmatprep.subr.bf16.mxu0 0
        %1571 = vmatpush1.bf16.msra.mxu0 0
        %1572 = vmatprep.subr.bf16.mxu0 0
        %1573 = vmatpush1.bf16.msra.mxu0 0
        %1574 = vmatprep.subr.bf16.mxu0 0
        %1575 = vmatpush1.bf16.msra.mxu0 0
        %1576 = vmatprep.subr.bf16.mxu0 0
        %1577 = vmatpush1.bf16.msra.mxu0 0
        %1578 = vmatprep.subr.bf16.mxu0 0
        %1579 = vmatpush1.bf16.msra.mxu0 %v1562
        %1580 = vmatprep.subr.bf16.mxu0 0
        %1581 = vmatpush2.bf16.msra.mxu0 0
        %1582 = vmatprep.subr.bf16.mxu0 0
        %1583 = vmatpush2.bf16.msra.mxu0 0
        %1584 = vmatprep.subr.bf16.mxu0 0
        %1585 = vmatpush2.bf16.msra.mxu0 0
        %1586 = vmatprep.subr.bf16.mxu0 0
        %1587 = vmatpush2.bf16.msra.mxu0 0
        %1588 = vmatprep.subr.bf16.mxu0 0
        %1589 = vmatpush2.bf16.msra.mxu0 0
        %1590 = vmatprep.subr.bf16.mxu0 0
        %1591 = vmatpush2.bf16.msra.mxu0 0
        %1592 = vmatprep.subr.bf16.mxu0 0
        %1593 = vmatpush2.bf16.msra.mxu0 0
        %1594 = vmatprep.subr.bf16.mxu0 0
        %1595 = vmatpush2.bf16.msra.mxu0 0
        %1596 = vmatprep.mubr.bf16.mxu0 0
        %1597 = vmatmul.mubr.bf16.gmra.mxu0 %v1559
        %v1598 = vpop.f32.mrf.mxu0
        %v1599 = vadd.f32 0.0, %v1598
        %v1600 = vpop.f32.mrf.mxu0
        %v1601 = vpop.f32.mrf.mxu0
        %v1602 = vpop.f32.mrf.mxu0
        %1603 = vdwg.mxu0
        %1605 = vrot.lane.b32.xlu0 %v1599, 64
        %v1606 = vpop.permute.xlu0 %1605
        %v1608 = vsel %vm1377, %v1548, %v1606
        %v1609 = vpack.c.bf16 %v1608, %v1608
        %v1610 = vld [vmem:[%s861] sm:$0xf]
        %v1611 = vld [vmem:[%s861 + $0x4] sm:$0xf]
        %v1612 = vld [vmem:[%s861 + $0x8] sm:$0xf]
        %v1613 = vld [vmem:[%s861 + $0xc] sm:$0xf]
        %v1614 = vld [vmem:[%s861 + $0x10] sm:$0xf]
        %v1615 = vld [vmem:[%s861 + $0x14] sm:$0xf]
        %v1616 = vld [vmem:[%s861 + $0x18] sm:$0xf]
        %v1617 = vld [vmem:[%s861 + $0x1c] sm:$0xf]
        %v1618 = vld [vmem:[%s861 + $0x20] sm:$0xf]
        %v1619 = vld [vmem:[%s861 + $0x24] sm:$0xf]
        %v1620 = vld [vmem:[%s861 + $0x28] sm:$0xf]
        %v1621 = vld [vmem:[%s861 + $0x2c] sm:$0xf]
        %v1622 = vld [vmem:[%s861 + $0x30] sm:$0xf]
        %v1623 = vld [vmem:[%s861 + $0x34] sm:$0xf]
        %v1624 = vld [vmem:[%s861 + $0x38] sm:$0xf]
        %v1625 = vld [vmem:[%s861 + $0x3c] sm:$0xf]
        %v1626 = vld [vmem:[%s869] sm:$0x1]
        %v1628 = vlaneseq
        %v1629 = vshrl.u32 %v1628, 7
        %v1630 = vsub.s32 0, %v1629
        %v1631 = vrot.slane %v1626, %v1630
        %v1649 = vunpack.c.l.b16 %v1610
        %v1650 = vunpack.c.l.b16 %v1611
        %v1651 = vunpack.c.l.b16 %v1612
        %v1652 = vunpack.c.l.b16 %v1613
        %v1653 = vunpack.c.l.b16 %v1614
        %v1654 = vunpack.c.l.b16 %v1615
        %v1655 = vunpack.c.l.b16 %v1616
        %v1656 = vunpack.c.l.b16 %v1617
        %v1657 = vunpack.c.l.b16 %v1618
        %v1658 = vunpack.c.l.b16 %v1619
        %v1659 = vunpack.c.l.b16 %v1620
        %v1660 = vunpack.c.l.b16 %v1621
        %v1661 = vunpack.c.l.b16 %v1622
        %v1662 = vunpack.c.l.b16 %v1623
        %v1663 = vunpack.c.l.b16 %v1624
        %v1664 = vunpack.c.l.b16 %v1625
        %v1665 = vpack.c.b16 %v1650, %v1649
        %v1666 = vpack.c.b16 %v1652, %v1651
        %v1667 = vpack.c.b16 %v1654, %v1653
        %v1668 = vpack.c.b16 %v1656, %v1655
        %v1669 = vpack.c.b16 %v1658, %v1657
        %v1670 = vpack.c.b16 %v1660, %v1659
        %v1671 = vpack.c.b16 %v1662, %v1661
        %v1672 = vpack.c.b16 %v1664, %v1663
        %1681 = vmatprep.subr.bf16.mxu0 0
        %1682 = vmatpush1.bf16.msra.mxu0 %v1672
        %1683 = vmatprep.subr.bf16.mxu0 0
        %1684 = vmatpush1.bf16.msra.mxu0 %v1671
        %1685 = vmatprep.subr.bf16.mxu0 0
        %1686 = vmatpush1.bf16.msra.mxu0 %v1670
        %1687 = vmatprep.subr.bf16.mxu0 0
        %1688 = vmatpush1.bf16.msra.mxu0 %v1669
        %1689 = vmatprep.subr.bf16.mxu0 0
        %1690 = vmatpush1.bf16.msra.mxu0 %v1668
        %1691 = vmatprep.subr.bf16.mxu0 0
        %1692 = vmatpush1.bf16.msra.mxu0 %v1667
        %1693 = vmatprep.subr.bf16.mxu0 0
        %1694 = vmatpush1.bf16.msra.mxu0 %v1666
        %1695 = vmatprep.subr.bf16.mxu0 0
        %1696 = vmatpush1.bf16.msra.mxu0 %v1665
        %1697 = vmatprep.subr.bf16.mxu0 0
        %1698 = vmatpush2.bf16.msra.mxu0 0
        %1699 = vmatprep.subr.bf16.mxu0 0
        %1700 = vmatpush2.bf16.msra.mxu0 0
        %1701 = vmatprep.subr.bf16.mxu0 0
        %1702 = vmatpush2.bf16.msra.mxu0 0
        %1703 = vmatprep.subr.bf16.mxu0 0
        %1704 = vmatpush2.bf16.msra.mxu0 0
        %1705 = vmatprep.subr.bf16.mxu0 0
        %1706 = vmatpush2.bf16.msra.mxu0 0
        %1707 = vmatprep.subr.bf16.mxu0 0
        %1708 = vmatpush2.bf16.msra.mxu0 0
        %1709 = vmatprep.subr.bf16.mxu0 0
        %1710 = vmatpush2.bf16.msra.mxu0 0
        %1711 = vmatprep.subr.bf16.mxu0 0
        %1712 = vmatpush2.bf16.msra.mxu0 0
        %1713 = vmatprep.mubr.bf16.mxu0 0
        %1714 = vmatmul.mubr.bf16.gmra.mxu0 %v1609
        %v1715 = vpop.f32.mrf.mxu0
        %v1716 = vadd.f32 %v1631, %v1715
        %v1717 = vpop.f32.mrf.mxu0
        %v1718 = vpop.f32.mrf.mxu0
        %v1719 = vpop.f32.mrf.mxu0
        %1720 = vdwg.mxu0
        %v1721 = vadd.f32 %v1716, %v1114
        %v1722 = vld [vmem:[%s877] sm:$0x1]
        %v1723 = vld [vmem:[%s885] sm:$0x1]
        %1724 = vadd.xlane.f32.xlu0 %v1721
        %v1725 = vpop.xlane.xlu0 %1724
        %v1726 = vrcp.pop 128.0
        %v1727 = vmul.f32 %v1725, %v1726
        %v1728 = vsub.f32 %v1721, %v1727
        %v1729 = vmul.f32 %v1728, %v1728
        %1730 = vadd.xlane.f32.xlu0 %v1729
        %v1731 = vpop.xlane.xlu0 %1730
        %v1732 = vmul.f32 %v1731, %v1726
        %v1733 = vadd.f32 %v1732, 1e-12
        %v1734 = vrsqrt.pop %v1733
        %v1735 = vmul.f32 %v1728, %v1734
        %v1737 = vlaneseq
        %v1738 = vshrl.u32 %v1737, 7
        %v1739 = vsub.s32 0, %v1738
        %v1740 = vrot.slane %v1722, %v1739
        %v1742 = vmul.f32 %v1735, %v1740
        %v1744 = vlaneseq
        %v1745 = vshrl.u32 %v1744, 7
        %v1746 = vsub.s32 0, %v1745
        %v1747 = vrot.slane %v1723, %v1746
        %v1749 = vadd.f32 %v1742, %v1747
        %v1750 = vpack.c.bf16 %v1749, %v1749
        %v1751 = vld [vmem:[%s894] sm:$0xff]
        %v1752 = vld [vmem:[%s894 + $0x8] sm:$0xff]
        %v1753 = vld [vmem:[%s894 + $0x10] sm:$0xff]
        %v1754 = vld [vmem:[%s894 + $0x18] sm:$0xff]
        %v1755 = vld [vmem:[%s894 + $0x20] sm:$0xff]
        %v1756 = vld [vmem:[%s894 + $0x28] sm:$0xff]
        %v1757 = vld [vmem:[%s894 + $0x30] sm:$0xff]
        %v1758 = vld [vmem:[%s894 + $0x38] sm:$0xff]
        %v1759 = vld [vmem:[%s894 + $0x40] sm:$0xff]
        %v1760 = vld [vmem:[%s894 + $0x48] sm:$0xff]
        %v1761 = vld [vmem:[%s894 + $0x50] sm:$0xff]
        %v1762 = vld [vmem:[%s894 + $0x58] sm:$0xff]
        %v1763 = vld [vmem:[%s894 + $0x60] sm:$0xff]
        %v1764 = vld [vmem:[%s894 + $0x68] sm:$0xff]
        %v1765 = vld [vmem:[%s894 + $0x70] sm:$0xff]
        %v1766 = vld [vmem:[%s894 + $0x78] sm:$0xff]
        %v1767 = vld [vmem:[%s903] sm:$0x3]
        %v1769 = vlaneseq
        %v1770 = vshrl.u32 %v1769, 7
        %v1771 = vsub.s32 0, %v1770
        %v1772 = vrot.slane %v1767, %v1771
        %v1773 = vlaneseq
        %v1774 = vshrl.u32 %v1773, 7
        %v1775 = vsub.s32 1, %v1774
        %v1776 = vrot.slane %v1767, %v1775
        %v1795 = vunpack.c.l.b16 %v1751
        %v1796 = vunpack.c.h.b16 %v1751
        %v1797 = vunpack.c.l.b16 %v1752
        %v1798 = vunpack.c.h.b16 %v1752
        %v1799 = vunpack.c.l.b16 %v1753
        %v1800 = vunpack.c.h.b16 %v1753
        %v1801 = vunpack.c.l.b16 %v1754
        %v1802 = vunpack.c.h.b16 %v1754
        %v1803 = vunpack.c.l.b16 %v1755
        %v1804 = vunpack.c.h.b16 %v1755
        %v1805 = vunpack.c.l.b16 %v1756
        %v1806 = vunpack.c.h.b16 %v1756
        %v1807 = vunpack.c.l.b16 %v1757
        %v1808 = vunpack.c.h.b16 %v1757
        %v1809 = vunpack.c.l.b16 %v1758
        %v1810 = vunpack.c.h.b16 %v1758
        %v1811 = vunpack.c.l.b16 %v1759
        %v1812 = vunpack.c.h.b16 %v1759
        %v1813 = vunpack.c.l.b16 %v1760
        %v1814 = vunpack.c.h.b16 %v1760
        %v1815 = vunpack.c.l.b16 %v1761
        %v1816 = vunpack.c.h.b16 %v1761
        %v1817 = vunpack.c.l.b16 %v1762
        %v1818 = vunpack.c.h.b16 %v1762
        %v1819 = vunpack.c.l.b16 %v1763
        %v1820 = vunpack.c.h.b16 %v1763
        %v1821 = vunpack.c.l.b16 %v1764
        %v1822 = vunpack.c.h.b16 %v1764
        %v1823 = vunpack.c.l.b16 %v1765
        %v1824 = vunpack.c.h.b16 %v1765
        %v1825 = vunpack.c.l.b16 %v1766
        %v1826 = vunpack.c.h.b16 %v1766
        %v1827 = vpack.c.b16 %v1797, %v1795
        %v1828 = vpack.c.b16 %v1798, %v1796
        %v1829 = vpack.c.b16 %v1801, %v1799
        %v1830 = vpack.c.b16 %v1802, %v1800
        %v1831 = vpack.c.b16 %v1805, %v1803
        %v1832 = vpack.c.b16 %v1806, %v1804
        %v1833 = vpack.c.b16 %v1809, %v1807
        %v1834 = vpack.c.b16 %v1810, %v1808
        %v1835 = vpack.c.b16 %v1813, %v1811
        %v1836 = vpack.c.b16 %v1814, %v1812
        %v1837 = vpack.c.b16 %v1817, %v1815
        %v1838 = vpack.c.b16 %v1818, %v1816
        %v1839 = vpack.c.b16 %v1821, %v1819
        %v1840 = vpack.c.b16 %v1822, %v1820
        %v1841 = vpack.c.b16 %v1825, %v1823
        %v1842 = vpack.c.b16 %v1826, %v1824
        %1859 = vmatprep.subr.bf16.mxu0 %v1842
        %1860 = vmatpush1.bf16.msra.mxu0 %v1841
        %1861 = vmatprep.subr.bf16.mxu0 %v1840
        %1862 = vmatpush1.bf16.msra.mxu0 %v1839
        %1863 = vmatprep.subr.bf16.mxu0 %v1838
        %1864 = vmatpush1.bf16.msra.mxu0 %v1837
        %1865 = vmatprep.subr.bf16.mxu0 %v1836
        %1866 = vmatpush1.bf16.msra.mxu0 %v1835
        %1867 = vmatprep.subr.bf16.mxu0 %v1834
        %1868 = vmatpush1.bf16.msra.mxu0 %v1833
        %1869 = vmatprep.subr.bf16.mxu0 %v1832
        %1870 = vmatpush1.bf16.msra.mxu0 %v1831
        %1871 = vmatprep.subr.bf16.mxu0 %v1830
        %1872 = vmatpush1.bf16.msra.mxu0 %v1829
        %1873 = vmatprep.subr.bf16.mxu0 %v1828
        %1874 = vmatpush1.bf16.msra.mxu0 %v1827
        %1875 = vmatprep.subr.bf16.mxu0 0
        %1876 = vmatpush2.bf16.msra.mxu0 0
        %1877 = vmatprep.subr.bf16.mxu0 0
        %1878 = vmatpush2.bf16.msra.mxu0 0
        %1879 = vmatprep.subr.bf16.mxu0 0
        %1880 = vmatpush2.bf16.msra.mxu0 0
        %1881 = vmatprep.subr.bf16.mxu0 0
        %1882 = vmatpush2.bf16.msra.mxu0 0
        %1883 = vmatprep.subr.bf16.mxu0 0
        %1884 = vmatpush2.bf16.msra.mxu0 0
        %1885 = vmatprep.subr.bf16.mxu0 0
        %1886 = vmatpush2.bf16.msra.mxu0 0
        %1887 = vmatprep.subr.bf16.mxu0 0
        %1888 = vmatpush2.bf16.msra.mxu0 0
        %1889 = vmatprep.subr.bf16.mxu0 0
        %1890 = vmatpush2.bf16.msra.mxu0 0
        %1891 = vmatprep.mubr.bf16.mxu0 0
        %1892 = vmatmul.mubr.bf16.gmra.mxu0 %v1750
        %v1893 = vpop.f32.mrf.mxu0
        %v1894 = vadd.f32 %v1772, %v1893
        %v1895 = vpop.f32.mrf.mxu0
        %v1896 = vadd.f32 %v1776, %v1895
        %v1897 = vpop.f32.mrf.mxu0
        %v1898 = vpop.f32.mrf.mxu0
        %1899 = vdwg.mxu0
        %v1900 = vmul.f32 %v1894, 0.5
        %v1901 = vmul.f32 %v1896, 0.5
        %v1902 = vmul.f32 %v1894, 0.044715
        %v1903 = vmul.f32 %v1896, 0.044715
        %v1904 = vmul.f32 %v1902, %v1894
        %v1905 = vmul.f32 %v1903, %v1896
        %v1906 = vmul.f32 %v1904, %v1894
        %v1907 = vmul.f32 %v1905, %v1896
        %v1908 = vadd.f32 %v1894, %v1906
        %v1909 = vadd.f32 %v1896, %v1907
        %v1910 = vmul.f32 %v1908, 0.7978845
        %v1911 = vmul.f32 %v1909, 0.7978845
        %v1912 = vtanh.pop %v1910
        %v1913 = vtanh.pop %v1911
        %v1914 = vadd.f32 %v1912, 1.0
        %v1915 = vadd.f32 %v1913, 1.0
        %v1916 = vmul.f32 %v1900, %v1914
        %v1917 = vmul.f32 %v1901, %v1915
        %v1918 = vpack.c.bf16 %v1916, %v1916
        %v1919 = vpack.c.bf16 %v1917, %v1917
        %v1920 = vld [vmem:[%s912] sm:$0xf]
        %v1921 = vld [vmem:[%s912 + $0x4] sm:$0xf]
        %v1922 = vld [vmem:[%s912 + $0x8] sm:$0xf]
        %v1923 = vld [vmem:[%s912 + $0xc] sm:$0xf]
        %v1924 = vld [vmem:[%s912 + $0x10] sm:$0xf]
        %v1925 = vld [vmem:[%s912 + $0x14] sm:$0xf]
        %v1926 = vld [vmem:[%s912 + $0x18] sm:$0xf]
        %v1927 = vld [vmem:[%s912 + $0x1c] sm:$0xf]
        %v1928 = vld [vmem:[%s912 + $0x20] sm:$0xf]
        %v1929 = vld [vmem:[%s912 + $0x24] sm:$0xf]
        %v1930 = vld [vmem:[%s912 + $0x28] sm:$0xf]
        %v1931 = vld [vmem:[%s912 + $0x2c] sm:$0xf]
        %v1932 = vld [vmem:[%s912 + $0x30] sm:$0xf]
        %v1933 = vld [vmem:[%s912 + $0x34] sm:$0xf]
        %v1934 = vld [vmem:[%s912 + $0x38] sm:$0xf]
        %v1935 = vld [vmem:[%s912 + $0x3c] sm:$0xf]
        %v1936 = vld [vmem:[%s912 + $0x40] sm:$0xf]
        %v1937 = vld [vmem:[%s912 + $0x44] sm:$0xf]
        %v1938 = vld [vmem:[%s912 + $0x48] sm:$0xf]
        %v1939 = vld [vmem:[%s912 + $0x4c] sm:$0xf]
        %v1940 = vld [vmem:[%s912 + $0x50] sm:$0xf]
        %v1941 = vld [vmem:[%s912 + $0x54] sm:$0xf]
        %v1942 = vld [vmem:[%s912 + $0x58] sm:$0xf]
        %v1943 = vld [vmem:[%s912 + $0x5c] sm:$0xf]
        %v1944 = vld [vmem:[%s912 + $0x60] sm:$0xf]
        %v1945 = vld [vmem:[%s912 + $0x64] sm:$0xf]
        %v1946 = vld [vmem:[%s912 + $0x68] sm:$0xf]
        %v1947 = vld [vmem:[%s912 + $0x6c] sm:$0xf]
        %v1948 = vld [vmem:[%s912 + $0x70] sm:$0xf]
        %v1949 = vld [vmem:[%s912 + $0x74] sm:$0xf]
        %v1950 = vld [vmem:[%s912 + $0x78] sm:$0xf]
        %v1951 = vld [vmem:[%s912 + $0x7c] sm:$0xf]
        %v1952 = vld [vmem:[%s920] sm:$0x1]
        %v1954 = vlaneseq
        %v1955 = vshrl.u32 %v1954, 7
        %v1956 = vsub.s32 0, %v1955
        %v1957 = vrot.slane %v1952, %v1956
        %v1991 = vunpack.c.l.b16 %v1920
        %v1992 = vunpack.c.l.b16 %v1921
        %v1993 = vunpack.c.l.b16 %v1922
        %v1994 = vunpack.c.l.b16 %v1923
        %v1995 = vunpack.c.l.b16 %v1924
        %v1996 = vunpack.c.l.b16 %v1925
        %v1997 = vunpack.c.l.b16 %v1926
        %v1998 = vunpack.c.l.b16 %v1927
        %v1999 = vunpack.c.l.b16 %v1928
        %v2000 = vunpack.c.l.b16 %v1929
        %v2001 = vunpack.c.l.b16 %v1930
        %v2002 = vunpack.c.l.b16 %v1931
        %v2003 = vunpack.c.l.b16 %v1932
        %v2004 = vunpack.c.l.b16 %v1933
        %v2005 = vunpack.c.l.b16 %v1934
        %v2006 = vunpack.c.l.b16 %v1935
        %v2007 = vunpack.c.l.b16 %v1936
        %v2008 = vunpack.c.l.b16 %v1937
        %v2009 = vunpack.c.l.b16 %v1938
        %v2010 = vunpack.c.l.b16 %v1939
        %v2011 = vunpack.c.l.b16 %v1940
        %v2012 = vunpack.c.l.b16 %v1941
        %v2013 = vunpack.c.l.b16 %v1942
        %v2014 = vunpack.c.l.b16 %v1943
        %v2015 = vunpack.c.l.b16 %v1944
        %v2016 = vunpack.c.l.b16 %v1945
        %v2017 = vunpack.c.l.b16 %v1946
        %v2018 = vunpack.c.l.b16 %v1947
        %v2019 = vunpack.c.l.b16 %v1948
        %v2020 = vunpack.c.l.b16 %v1949
        %v2021 = vunpack.c.l.b16 %v1950
        %v2022 = vunpack.c.l.b16 %v1951
        %v2023 = vpack.c.b16 %v1992, %v1991
        %v2024 = vpack.c.b16 %v1994, %v1993
        %v2025 = vpack.c.b16 %v1996, %v1995
        %v2026 = vpack.c.b16 %v1998, %v1997
        %v2027 = vpack.c.b16 %v2000, %v1999
        %v2028 = vpack.c.b16 %v2002, %v2001
        %v2029 = vpack.c.b16 %v2004, %v2003
        %v2030 = vpack.c.b16 %v2006, %v2005
        %v2031 = vpack.c.b16 %v2008, %v2007
        %v2032 = vpack.c.b16 %v2010, %v2009
        %v2033 = vpack.c.b16 %v2012, %v2011
        %v2034 = vpack.c.b16 %v2014, %v2013
        %v2035 = vpack.c.b16 %v2016, %v2015
        %v2036 = vpack.c.b16 %v2018, %v2017
        %v2037 = vpack.c.b16 %v2020, %v2019
        %v2038 = vpack.c.b16 %v2022, %v2021
        %2055 = vmatprep.subr.bf16.mxu0 0
        %2056 = vmatpush1.bf16.msra.mxu0 %v2030
        %2057 = vmatprep.subr.bf16.mxu0 0
        %2058 = vmatpush1.bf16.msra.mxu0 %v2029
        %2059 = vmatprep.subr.bf16.mxu0 0
        %2060 = vmatpush1.bf16.msra.mxu0 %v2028
        %2061 = vmatprep.subr.bf16.mxu0 0
        %2062 = vmatpush1.bf16.msra.mxu0 %v2027
        %2063 = vmatprep.subr.bf16.mxu0 0
        %2064 = vmatpush1.bf16.msra.mxu0 %v2026
        %2065 = vmatprep.subr.bf16.mxu0 0
        %2066 = vmatpush1.bf16.msra.mxu0 %v2025
        %2067 = vmatprep.subr.bf16.mxu0 0
        %2068 = vmatpush1.bf16.msra.mxu0 %v2024
        %2069 = vmatprep.subr.bf16.mxu0 0
        %2070 = vmatpush1.bf16.msra.mxu0 %v2023
        %2071 = vmatprep.subr.bf16.mxu0 0
        %2072 = vmatpush2.bf16.msra.mxu0 %v2038
        %2073 = vmatprep.subr.bf16.mxu0 0
        %2074 = vmatpush2.bf16.msra.mxu0 %v2037
        %2075 = vmatprep.subr.bf16.mxu0 0
        %2076 = vmatpush2.bf16.msra.mxu0 %v2036
        %2077 = vmatprep.subr.bf16.mxu0 0
        %2078 = vmatpush2.bf16.msra.mxu0 %v2035
        %2079 = vmatprep.subr.bf16.mxu0 0
        %2080 = vmatpush2.bf16.msra.mxu0 %v2034
        %2081 = vmatprep.subr.bf16.mxu0 0
        %2082 = vmatpush2.bf16.msra.mxu0 %v2033
        %2083 = vmatprep.subr.bf16.mxu0 0
        %2084 = vmatpush2.bf16.msra.mxu0 %v2032
        %2085 = vmatprep.subr.bf16.mxu0 0
        %2086 = vmatpush2.bf16.msra.mxu0 %v2031
        %2087 = vmatprep.mubr.bf16.mxu0 %v1919
        %2088 = vmatmul.mubr.bf16.gmra.mxu0 %v1918
        %v2089 = vpop.f32.mrf.mxu0
        %v2090 = vadd.f32 %v1957, %v2089
        %v2091 = vpop.f32.mrf.mxu0
        %v2092 = vpop.f32.mrf.mxu0
        %v2093 = vpop.f32.mrf.mxu0
        %2094 = vdwg.mxu0
        %v2095 = vadd.f32 %v2090, %v1749
        %v2096 = vld [vmem:[%s928] sm:$0x1]
        %v2097 = vld [vmem:[%s936] sm:$0x1]
        %2098 = vadd.xlane.f32.xlu0 %v2095
        %v2099 = vpop.xlane.xlu0 %2098
        %v2100 = vmul.f32 %v2099, %v1726
        %v2101 = vsub.f32 %v2095, %v2100
        %v2102 = vmul.f32 %v2101, %v2101
        %2103 = vadd.xlane.f32.xlu0 %v2102
        %v2104 = vpop.xlane.xlu0 %2103
        %v2105 = vmul.f32 %v2104, %v1726
        %v2106 = vadd.f32 %v2105, 1e-12
        %v2107 = vrsqrt.pop %v2106
        %v2108 = vmul.f32 %v2101, %v2107
        %v2110 = vlaneseq
        %v2111 = vshrl.u32 %v2110, 7
        %v2112 = vsub.s32 0, %v2111
        %v2113 = vrot.slane %v2096, %v2112
        %v2115 = vmul.f32 %v2108, %v2113
        %v2117 = vlaneseq
        %v2118 = vshrl.u32 %v2117, 7
        %v2119 = vsub.s32 0, %v2118
        %v2120 = vrot.slane %v2097, %v2119
        %v2122 = vadd.f32 %v2115, %v2120
        %2123 = vst [vmem:[#allocation2] sm:$0xff] %v2122
        %p2124 = scmp.eq.s32.totalorder %s39, 1
        // Predicated region
        $region161: #{bert_sentiment_forward.1} parent=99 // pred_check
          %p2125 = pneg %p2124
        $region162: #{bert_sentiment_forward.1} parent=99 // pred_check_branch
          %2127 = sbr.rel (%p2125) target = $region164
        $region163: #{bert_sentiment_forward.1} parent=99 // pred_region
          %v2128 = vpack.c.bf16 %v2122, %v2122
          %v2129 = vld [vmem:[%s16] sm:$0xf]
          %v2130 = vld [vmem:[%s16 + $0x4] sm:$0xf]
          %v2131 = vld [vmem:[%s16 + $0x8] sm:$0xf]
          %v2132 = vld [vmem:[%s16 + $0xc] sm:$0xf]
          %v2133 = vld [vmem:[%s16 + $0x10] sm:$0xf]
          %v2134 = vld [vmem:[%s16 + $0x14] sm:$0xf]
          %v2135 = vld [vmem:[%s16 + $0x18] sm:$0xf]
          %v2136 = vld [vmem:[%s16 + $0x1c] sm:$0xf]
          %v2137 = vld [vmem:[%s16 + $0x20] sm:$0xf]
          %v2138 = vld [vmem:[%s16 + $0x24] sm:$0xf]
          %v2139 = vld [vmem:[%s16 + $0x28] sm:$0xf]
          %v2140 = vld [vmem:[%s16 + $0x2c] sm:$0xf]
          %v2141 = vld [vmem:[%s16 + $0x30] sm:$0xf]
          %v2142 = vld [vmem:[%s16 + $0x34] sm:$0xf]
          %v2143 = vld [vmem:[%s16 + $0x38] sm:$0xf]
          %v2144 = vld [vmem:[%s16 + $0x3c] sm:$0xf]
          %v2145 = vld [vmem:[%s17] sm:$0x1]
          %v2147 = vlaneseq
          %v2148 = vshrl.u32 %v2147, 7
          %v2149 = vsub.s32 0, %v2148
          %v2150 = vrot.slane %v2145, %v2149
          %v2168 = vunpack.c.l.b16 %v2129
          %v2169 = vunpack.c.l.b16 %v2130
          %v2170 = vunpack.c.l.b16 %v2131
          %v2171 = vunpack.c.l.b16 %v2132
          %v2172 = vunpack.c.l.b16 %v2133
          %v2173 = vunpack.c.l.b16 %v2134
          %v2174 = vunpack.c.l.b16 %v2135
          %v2175 = vunpack.c.l.b16 %v2136
          %v2176 = vunpack.c.l.b16 %v2137
          %v2177 = vunpack.c.l.b16 %v2138
          %v2178 = vunpack.c.l.b16 %v2139
          %v2179 = vunpack.c.l.b16 %v2140
          %v2180 = vunpack.c.l.b16 %v2141
          %v2181 = vunpack.c.l.b16 %v2142
          %v2182 = vunpack.c.l.b16 %v2143
          %v2183 = vunpack.c.l.b16 %v2144
          %v2184 = vpack.c.b16 %v2169, %v2168
          %v2185 = vpack.c.b16 %v2171, %v2170
          %v2186 = vpack.c.b16 %v2173, %v2172
          %v2187 = vpack.c.b16 %v2175, %v2174
          %v2188 = vpack.c.b16 %v2177, %v2176
          %v2189 = vpack.c.b16 %v2179, %v2178
          %v2190 = vpack.c.b16 %v2181, %v2180
          %v2191 = vpack.c.b16 %v2183, %v2182
          %2200 = vmatprep.subr.bf16.mxu0 0
          %2201 = vmatpush1.bf16.msra.mxu0 %v2191
          %2202 = vmatprep.subr.bf16.mxu0 0
          %2203 = vmatpush1.bf16.msra.mxu0 %v2190
          %2204 = vmatprep.subr.bf16.mxu0 0
          %2205 = vmatpush1.bf16.msra.mxu0 %v2189
          %2206 = vmatprep.subr.bf16.mxu0 0
          %2207 = vmatpush1.bf16.msra.mxu0 %v2188
          %2208 = vmatprep.subr.bf16.mxu0 0
          %2209 = vmatpush1.bf16.msra.mxu0 %v2187
          %2210 = vmatprep.subr.bf16.mxu0 0
          %2211 = vmatpush1.bf16.msra.mxu0 %v2186
          %2212 = vmatprep.subr.bf16.mxu0 0
          %2213 = vmatpush1.bf16.msra.mxu0 %v2185
          %2214 = vmatprep.subr.bf16.mxu0 0
          %2215 = vmatpush1.bf16.msra.mxu0 %v2184
          %2216 = vmatprep.subr.bf16.mxu0 0
          %2217 = vmatpush2.bf16.msra.mxu0 0
          %2218 = vmatprep.subr.bf16.mxu0 0
          %2219 = vmatpush2.bf16.msra.mxu0 0
          %2220 = vmatprep.subr.bf16.mxu0 0
          %2221 = vmatpush2.bf16.msra.mxu0 0
          %2222 = vmatprep.subr.bf16.mxu0 0
          %2223 = vmatpush2.bf16.msra.mxu0 0
          %2224 = vmatprep.subr.bf16.mxu0 0
          %2225 = vmatpush2.bf16.msra.mxu0 0
          %2226 = vmatprep.subr.bf16.mxu0 0
          %2227 = vmatpush2.bf16.msra.mxu0 0
          %2228 = vmatprep.subr.bf16.mxu0 0
          %2229 = vmatpush2.bf16.msra.mxu0 0
          %2230 = vmatprep.subr.bf16.mxu0 0
          %2231 = vmatpush2.bf16.msra.mxu0 0
          %2232 = vmatprep.mubr.bf16.mxu0 0
          %2233 = vmatmul.mubr.bf16.gmra.mxu0 %v2128
          %v2234 = vpop.f32.mrf.mxu0
          %v2235 = vadd.f32 %v2150, %v2234
          %v2236 = vpop.f32.mrf.mxu0
          %v2237 = vpop.f32.mrf.mxu0
          %v2238 = vpop.f32.mrf.mxu0
          %2239 = vdwg.mxu0
          %v2240 = vtanh.pop %v2235
          %v2241 = vpack.c.bf16 %v2240, %v2240
          %v2242 = vld [vmem:[#allocation17] sm:$0xf]
          %v2243 = vld [vmem:[#allocation17 + $0x4] sm:$0xf]
          %v2244 = vld [vmem:[#allocation17 + $0x8] sm:$0xf]
          %v2245 = vld [vmem:[#allocation17 + $0xc] sm:$0xf]
          %v2246 = vld [vmem:[#allocation17 + $0x10] sm:$0xf]
          %v2247 = vld [vmem:[#allocation17 + $0x14] sm:$0xf]
          %v2248 = vld [vmem:[#allocation17 + $0x18] sm:$0xf]
          %v2249 = vld [vmem:[#allocation17 + $0x1c] sm:$0xf]
          %v2250 = vld [vmem:[#allocation17 + $0x20] sm:$0xf]
          %v2251 = vld [vmem:[#allocation17 + $0x24] sm:$0xf]
          %v2252 = vld [vmem:[#allocation17 + $0x28] sm:$0xf]
          %v2253 = vld [vmem:[#allocation17 + $0x2c] sm:$0xf]
          %v2254 = vld [vmem:[#allocation17 + $0x30] sm:$0xf]
          %v2255 = vld [vmem:[#allocation17 + $0x34] sm:$0xf]
          %v2256 = vld [vmem:[#allocation17 + $0x38] sm:$0xf]
          %v2257 = vld [vmem:[#allocation17 + $0x3c] sm:$0xf]
          %v2258 = vld [vmem:[#allocation18] sm:$0x1]
          %v2260 = vlaneseq
          %v2261 = vshrl.u32 %v2260, 7
          %v2262 = vsub.s32 0, %v2261
          %v2263 = vrot.slane %v2258, %v2262
          %v2281 = vunpack.c.l.b16 %v2242
          %v2282 = vunpack.c.l.b16 %v2243
          %v2283 = vunpack.c.l.b16 %v2244
          %v2284 = vunpack.c.l.b16 %v2245
          %v2285 = vunpack.c.l.b16 %v2246
          %v2286 = vunpack.c.l.b16 %v2247
          %v2287 = vunpack.c.l.b16 %v2248
          %v2288 = vunpack.c.l.b16 %v2249
          %v2289 = vunpack.c.l.b16 %v2250
          %v2290 = vunpack.c.l.b16 %v2251
          %v2291 = vunpack.c.l.b16 %v2252
          %v2292 = vunpack.c.l.b16 %v2253
          %v2293 = vunpack.c.l.b16 %v2254
          %v2294 = vunpack.c.l.b16 %v2255
          %v2295 = vunpack.c.l.b16 %v2256
          %v2296 = vunpack.c.l.b16 %v2257
          %v2297 = vpack.c.b16 %v2282, %v2281
          %v2298 = vpack.c.b16 %v2284, %v2283
          %v2299 = vpack.c.b16 %v2286, %v2285
          %v2300 = vpack.c.b16 %v2288, %v2287
          %v2301 = vpack.c.b16 %v2290, %v2289
          %v2302 = vpack.c.b16 %v2292, %v2291
          %v2303 = vpack.c.b16 %v2294, %v2293
          %v2304 = vpack.c.b16 %v2296, %v2295
          %2313 = vmatprep.subr.bf16.mxu0 0
          %2314 = vmatpush1.bf16.msra.mxu0 %v2304
          %2315 = vmatprep.subr.bf16.mxu0 0
          %2316 = vmatpush1.bf16.msra.mxu0 %v2303
          %2317 = vmatprep.subr.bf16.mxu0 0
          %2318 = vmatpush1.bf16.msra.mxu0 %v2302
          %2319 = vmatprep.subr.bf16.mxu0 0
          %2320 = vmatpush1.bf16.msra.mxu0 %v2301
          %2321 = vmatprep.subr.bf16.mxu0 0
          %2322 = vmatpush1.bf16.msra.mxu0 %v2300
          %2323 = vmatprep.subr.bf16.mxu0 0
          %2324 = vmatpush1.bf16.msra.mxu0 %v2299
          %2325 = vmatprep.subr.bf16.mxu0 0
          %2326 = vmatpush1.bf16.msra.mxu0 %v2298
          %2327 = vmatprep.subr.bf16.mxu0 0
          %2328 = vmatpush1.bf16.msra.mxu0 %v2297
          %2329 = vmatprep.subr.bf16.mxu0 0
          %2330 = vmatpush2.bf16.msra.mxu0 0
          %2331 = vmatprep.subr.bf16.mxu0 0
          %2332 = vmatpush2.bf16.msra.mxu0 0
          %2333 = vmatprep.subr.bf16.mxu0 0
          %2334 = vmatpush2.bf16.msra.mxu0 0
          %2335 = vmatprep.subr.bf16.mxu0 0
          %2336 = vmatpush2.bf16.msra.mxu0 0
          %2337 = vmatprep.subr.bf16.mxu0 0
          %2338 = vmatpush2.bf16.msra.mxu0 0
          %2339 = vmatprep.subr.bf16.mxu0 0
          %2340 = vmatpush2.bf16.msra.mxu0 0
          %2341 = vmatprep.subr.bf16.mxu0 0
          %2342 = vmatpush2.bf16.msra.mxu0 0
          %2343 = vmatprep.subr.bf16.mxu0 0
          %2344 = vmatpush2.bf16.msra.mxu0 0
          %2345 = vmatprep.mubr.bf16.mxu0 0
          %2346 = vmatmul.mubr.bf16.gmra.mxu0 %v2241
          %v2347 = vpop.f32.mrf.mxu0
          %v2348 = vadd.f32 %v2263, %v2347
          %v2349 = vpop.f32.mrf.mxu0
          %v2350 = vpop.f32.mrf.mxu0
          %v2351 = vpop.f32.mrf.mxu0
          %2352 = vdwg.mxu0
          %2353 = vst [vmem:[%s1078] sm:$0xff] %v2348
        $region164: #{bert_sentiment_forward.1} parent=99 // pred_fallthru
          _
        %p2354 = scmp.lt.s32.totalorder %s38, 1
        %s2355 = scalar_select %p2354, %s38, 1
        %s2356 = smul.addr %s2355, 8
        %s2357 = scalar_lea.vmem %s20, %s2356
        // Predicated region
        $region165: #{bert_sentiment_forward.1} parent=99 // pred_check
          %p2358 = pneg %p554
        $region166: #{bert_sentiment_forward.1} parent=99 // pred_check_branch
          %2360 = sbr.rel (%p2358) target = $region168
        $region167: #{bert_sentiment_forward.1} parent=99 // pred_region
          _
        $region168: #{bert_sentiment_forward.1} parent=99 // pred_fallthru
          _
      $region100: #{bert_sentiment_forward.1} parent=5 // pred_fallthru
        _
      %p2361 = scmp.le.s32.totalorder 2, %s29
      // Predicated region
      $region169: #{bert_sentiment_forward.1} parent=5 // pred_check
        %p2362 = pneg %p2361
      $region170: #{bert_sentiment_forward.1} parent=5 // pred_check_branch
        %2364 = sbr.rel (%p2362) target = $region172
      $region171: #{bert_sentiment_forward.1} parent=5 // pred_region
        %s2365 = ssub.s32 %s29, 2
        // Predicated region
        $region173: #{bert_sentiment_forward.1} parent=171 // pred_check
          %p2366 = pneg %p560
        $region174: #{bert_sentiment_forward.1} parent=171 // pred_check_branch
          %2368 = sbr.rel (%p2366) target = $region176
        $region175: #{bert_sentiment_forward.1} parent=171 // pred_region
          %p2369 = scmp.lt.s32.totalorder %s40, 1
          %s2370 = scalar_select %p2369, %s40, 1
          %s2371 = smul.addr %s2370, 8
          %s2372 = scalar_lea.vmem %s20, %s2371
        $region176: #{bert_sentiment_forward.1} parent=171 // pred_fallthru
          _
      $region172: #{bert_sentiment_forward.1} parent=5 // pred_fallthru
        _
    $region6: #{bert_sentiment_forward.1} parent=1 // loop_footer
      %s33 = sadd.s32 1, %s29
    $region7: #{bert_sentiment_forward.1} parent=1 // loop_footer_branch
      %28 = sbr.rel target = $region3
    $region8: #{bert_sentiment_forward.1} parent=1 // loop_exit
      _
    %2373 = vsyncpa [#allocation4], 1
    %s2374 = scalar_lea.sflag [#allocation4], 1
    %2375 = vsyncpa %s2374, 1
    %2376 = vsyncpa [#allocation6], 1
    %2377 = vsyncpa [#allocation19], 1

</llo_original>
